<compile_context>
chip_gen: v6e
topology: v6e:2x2x1
jax: 0.10.0
libtpu: 0.0.40
codegen_flags: <defaults>
</compile_context>

<pallas_src>
import functools

import jax
import jax.numpy as jnp
from jax.experimental import pallas as pl
from jax.experimental.pallas import tpu as pltpu

BN_EPS = 1e-5


def _pair(v):
    return (v, v) if isinstance(v, int) else (int(v[0]), int(v[1]))


def _round_up(v, m):
    return (v + m - 1) // m * m


def _tile_budget():
    """Generation-aware M-tile / scoped-VMEM budget.

    v5e/v6e have 128 MiB physical VMEM -> bigger tiles + 64 MiB scoped limit.
    v7x has 64 MiB -> keep tm<=512 and the 32 MiB scoped default.  Unknown -> v7x-safe.
    """
    try:
        vmem = int(pltpu.get_tpu_info().vmem_capacity_bytes)
    except Exception:  # pragma: no cover - conservative fallback
        vmem = 64 * 1024 * 1024
    if vmem >= 100 * 1024 * 1024:          # v5e / v6e
        return 1024, 64 * 1024 * 1024
    return 512, 32 * 1024 * 1024           # v7x / unknown


MAX_TILE_M, VMEM_LIMIT = _tile_budget()


def _choose_tile(m, mult=16):
    """Pick tm so that padding waste is bounded by one tile (never ~2x)."""
    ntiles = -(-m // MAX_TILE_M)
    tm = _round_up(-(-m // ntiles), mult)
    m_pad = _round_up(m, tm)
    return tm, m_pad


# -----------------------------------------------------------------------------------
# Pass 1: conv tile (MXU, bf16 operands / f32 accumulate) + per-tile partial BN stats.
# Fully parallel over M tiles (v7x megacore-shardable); finalize happens in XLA.
# -----------------------------------------------------------------------------------
def _conv_stats_kernel(patches_ref, w_ref, y_ref, ssum_ref, ssq_ref):
    y = jnp.dot(patches_ref[...], w_ref[...], preferred_element_type=jnp.float32)
    y_ref[...] = y.astype(y_ref.dtype)                                  # bf16 store
    # Per-tile statistics from the f32 accumulator.  Zero-padded M rows give y == 0
    # exactly, so they contribute nothing; the wrapper divides by the true M.
    ssum_ref[...] = jnp.sum(y, axis=0, keepdims=True)[None]             # (1,1,Cpad)
    ssq_ref[...] = jnp.sum(y * y, axis=0, keepdims=True)[None]


# -----------------------------------------------------------------------------------
# Pass 2: y * scale + shift, ReLU (one FMA + max per element), bf16 out.
# -----------------------------------------------------------------------------------
def _bn_relu_kernel(y_ref, scale_ref, shift_ref, out_ref):
    y = y_ref[...].astype(jnp.float32)
    out_ref[...] = jnp.maximum(y * scale_ref[...] + shift_ref[...], 0.0
                               ).astype(out_ref.dtype)


def _im2col(x_nhwc, kh, kw, sh, sw, ph, pw):
    """Extract conv patches: (N*Ho*Wo, kh*kw*Cin), K ordered as (kh, kw, Cin)."""
    n, h, w, cin = x_nhwc.shape
    if kh == 1 and kw == 1 and sh == 1 and sw == 1 and ph == 0 and pw == 0:
        # 1x1 / stride-1 conv: patches are just a reshape of NHWC (no copy inflation).
        return x_nhwc.reshape(n * h * w, cin), h, w
    xp = jnp.pad(x_nhwc, ((0, 0), (ph, ph), (pw, pw), (0, 0)))
    ho = (h + 2 * ph - kh) // sh + 1
    wo = (w + 2 * pw - kw) // sw + 1
    cols = []
    for i in range(kh):
        for j in range(kw):
            cols.append(xp[:, i:i + sh * ho:sh, j:j + sw * wo:sw, :])   # (N, Ho, Wo, Cin)
    patches = jnp.concatenate(cols, axis=-1)                            # (N, Ho, Wo, K)
    return patches.reshape(n * ho * wo, kh * kw * cin), ho, wo


@functools.partial(jax.jit, static_argnames=("stride", "padding"))
def conv_block_forward(x_nchw, conv_w_oihw, bn_gamma, bn_beta, *, stride, padding):
    """ConvBlock forward: Conv2d(bias=False) -> BatchNorm2d (batch stats) -> ReLU.

    Returns bf16 NCHW (activations stay bf16 inside the stem)."""
    n, cin, h, w = x_nchw.shape
    cout, cin_w, kh, kw = conv_w_oihw.shape
    assert cin == cin_w
    sh, sw = _pair(stride)
    ph, pw = _pair(padding)

    # NCHW -> NHWC, bf16 matmul operands, im2col (XLA glue).
    x_nhwc = jnp.transpose(x_nchw, (0, 2, 3, 1)).astype(jnp.bfloat16)
    patches, ho, wo = _im2col(x_nhwc, kh, kw, sh, sw, ph, pw)           # (M, K) bf16
    m, k = patches.shape

    # OIHW -> (K, Cout) matching the patch ordering.  Lane-pad Cout to 128 (lane-dense
    # stores, no masked vst) and pad K to a multiple of 16 (clean bf16 sublane packing).
    cpad = _round_up(cout, 128)
    kpad = _round_up(k, 16)
    w_mat = jnp.transpose(conv_w_oihw, (2, 3, 1, 0)).reshape(k, cout).astype(jnp.bfloat16)
    w_mat = jnp.pad(w_mat, ((0, kpad - k), (0, cpad - cout)))

    tm, m_pad = _choose_tile(m)
    patches = jnp.pad(patches, ((0, m_pad - m), (0, kpad - k)))
    ntiles = m_pad // tm
    grid = (ntiles,)

    # Pass 1: conv matmul + per-tile partial stats (fully parallel over M tiles).
    y_bf16, psum, psq = pl.pallas_call(
        _conv_stats_kernel,
        out_shape=(jax.ShapeDtypeStruct((m_pad, cpad), jnp.bfloat16),
                   jax.ShapeDtypeStruct((ntiles, 1, cpad), jnp.float32),
                   jax.ShapeDtypeStruct((ntiles, 1, cpad), jnp.float32)),
        grid_spec=pltpu.PrefetchScalarGridSpec(
            num_scalar_prefetch=0,
            grid=grid,
            in_specs=[
                pl.BlockSpec((tm, kpad), lambda i: (i, 0)),
                pl.BlockSpec((kpad, cpad), lambda i: (0, 0)),
            ],
            out_specs=[
                pl.BlockSpec((tm, cpad), lambda i: (i, 0)),
                pl.BlockSpec((1, 1, cpad), lambda i: (i, 0, 0)),
                pl.BlockSpec((1, 1, cpad), lambda i: (i, 0, 0)),
            ]),
        compiler_params=pltpu.CompilerParams(
            dimension_semantics=("parallel",),
            vmem_limit_bytes=VMEM_LIMIT),
    )(patches, w_mat)

    # Finalize BN scale/shift from the f32 partial sums (tiny XLA reduction).
    inv_m = 1.0 / float(m)
    gamma_pad = jnp.pad(bn_gamma.astype(jnp.float32), (0, cpad - cout))
    beta_pad = jnp.pad(bn_beta.astype(jnp.float32), (0, cpad - cout))
    mean = jnp.sum(psum[:, 0, :], axis=0) * inv_m
    # TODO(synk): E[y^2]-E[y]^2 can cancel when |mean| >> std; a shifted-mean / Welford
    # accumulation would be more robust (f32 is ample at these magnitudes).
    var = jnp.maximum(jnp.sum(psq[:, 0, :], axis=0) * inv_m - mean * mean, 0.0)
    scale = gamma_pad * jax.lax.rsqrt(var + BN_EPS)
    shift = beta_pad - mean * scale
    scale2d = scale.reshape(1, cpad)
    shift2d = shift.reshape(1, cpad)

    # Pass 2: normalize + ReLU, bf16 in / bf16 out (parallel / megacore-shardable).
    out_flat = pl.pallas_call(
        _bn_relu_kernel,
        out_shape=jax.ShapeDtypeStruct((m_pad, cpad), jnp.bfloat16),
        grid_spec=pltpu.PrefetchScalarGridSpec(
            num_scalar_prefetch=0,
            grid=grid,
            in_specs=[
                pl.BlockSpec((tm, cpad), lambda i: (i, 0)),
                pl.BlockSpec((1, cpad), lambda i: (0, 0)),
                pl.BlockSpec((1, cpad), lambda i: (0, 0)),
            ],
            out_specs=pl.BlockSpec((tm, cpad), lambda i: (i, 0))),
        compiler_params=pltpu.CompilerParams(
            dimension_semantics=("parallel",),
            vmem_limit_bytes=VMEM_LIMIT),
    )(y_bf16, scale2d, shift2d)

    # Strip padding, (M, Cout) -> NHWC -> NCHW (glue), stays bf16.
    out_nhwc = out_flat[:m, :cout].reshape(n, ho, wo, cout)
    return jnp.transpose(out_nhwc, (0, 3, 1, 2))


# -----------------------------------------------------------------------------------
# MaxPool2d(kernel_size=3, stride=2).
# Horizontal 3-window max is a fused XLA elementwise pass (no 9x stacked temp); the
# Pallas kernel reduces the three vertical row-shifted views.
# -----------------------------------------------------------------------------------
def _maxpool_kernel(a_ref, b_ref, c_ref, out_ref):
    out_ref[...] = jnp.maximum(jnp.maximum(a_ref[...], b_ref[...]), c_ref[...])


@jax.jit
def max_pool_3x3_s2(x_nchw):
    n, c, h, w = x_nchw.shape
    ho = (h - 3) // 2 + 1
    wo = (w - 3) // 2 + 1
    x = jnp.transpose(x_nchw, (0, 2, 3, 1))                             # NHWC (glue)
    # Separable max: horizontal windows first -> (N, H, Wo, C), ~half the input bytes.
    th = jnp.maximum(jnp.maximum(x[:, :, 0:2 * wo:2, :], x[:, :, 1:1 + 2 * wo:2, :]),
                     x[:, :, 2:2 + 2 * wo:2, :])
    m = n * ho * wo
    a = th[:, 0:2 * ho:2].reshape(m, c)
    b = th[:, 1:1 + 2 * ho:2].reshape(m, c)
    d = th[:, 2:2 + 2 * ho:2].reshape(m, c)

    tm, m_pad = _choose_tile(m)
    pad = m_pad - m
    a, b, d = [jnp.pad(v, ((0, pad), (0, 0))) for v in (a, b, d)]

    out = pl.pallas_call(
        _maxpool_kernel,
        out_shape=jax.ShapeDtypeStruct((m_pad, c), x_nchw.dtype),
        grid_spec=pltpu.PrefetchScalarGridSpec(
            num_scalar_prefetch=0,
            grid=(m_pad // tm,),
            in_specs=[pl.BlockSpec((tm, c), lambda i: (i, 0)),
                      pl.BlockSpec((tm, c), lambda i: (i, 0)),
                      pl.BlockSpec((tm, c), lambda i: (i, 0))],
            out_specs=pl.BlockSpec((tm, c), lambda i: (i, 0))),
        compiler_params=pltpu.CompilerParams(
            dimension_semantics=("parallel",),
            vmem_limit_bytes=VMEM_LIMIT),
    )(a, b, d)

    out = out[:m].reshape(n, ho, wo, c)
    return jnp.transpose(out, (0, 3, 1, 2))


# -----------------------------------------------------------------------------------
# InceptionStem wiring (same data flow / concat order as the PyTorch module).
# The two parallel 1x1 heads of conv5 (same input, Cout=64 each) are fused into one
# Cout=128 ConvBlock; per-channel BN over the same batch makes this numerically
# identical to running them separately.
# -----------------------------------------------------------------------------------
def _stem_defs(in_channels):
    # name -> (Cin, Cout, kh, kw)
    return {
        "conv1":    (in_channels, 32, 3, 3),
        "conv2":    (32, 32, 3, 3),
        "conv3":    (32, 64, 3, 3),
        "conv4_b1": (64, 96, 3, 3),
        "c5_b1_0":  (160, 64, 1, 1),
        "c5_b1_1":  (64, 64, 7, 1),
        "c5_b1_2":  (64, 64, 1, 7),
        "c5_b1_3":  (64, 96, 3, 3),
        "c5_b2_0":  (160, 64, 1, 1),
        "c5_b2_1":  (64, 96, 3, 3),
        "conv6_b2": (192, 192, 3, 3),
    }


def stem_forward(x, params, conv_block, max_pool):
    def cb(name, inp, stride, padding):
        w, g, b = params[name]
        return conv_block(inp, w, g, b, stride=stride, padding=padding)

    x = cb("conv1", x, 2, 0)
    x = cb("conv2", x, 1, 0)
    x = cb("conv3", x, 1, 1)
    x = jnp.concatenate([cb("conv4_b1", x, 2, 0), max_pool(x)], axis=1)

    # Fused 1x1 heads of the two conv5 branches (shared input, per-channel BN).
    w1, g1, be1 = params["c5_b1_0"]
    w2, g2, be2 = params["c5_b2_0"]
    fused = conv_block(x,
                       jnp.concatenate([w1, w2], axis=0),
                       jnp.concatenate([g1, g2], axis=0),
                       jnp.concatenate([be1, be2], axis=0),
                       stride=1, padding=0)
    c1 = w1.shape[0]
    b1, b2 = fused[:, :c1], fused[:, c1:]

    b1 = cb("c5_b1_1", b1, 1, (3, 0))
    b1 = cb("c5_b1_2", b1, 1, (0, 3))
    b1 = cb("c5_b1_3", b1, 1, 0)
    b2 = cb("c5_b2_1", b2, 1, 0)
    x = jnp.concatenate([b1, b2], axis=1)
    x = jnp.concatenate([max_pool(x), cb("conv6_b2", x, 2, 0)], axis=1)
    return x


def pallas_stem_forward(x, params):
    """Full stem through the Pallas kernels; bf16 internally, f32 at the boundary."""
    out = stem_forward(x, params, conv_block_forward, max_pool_3x3_s2)
    return out.astype(jnp.float32)


# -----------------------------------------------------------------------------------
# Pure-JAX references (bf16 conv operands / f32 accumulate, mirroring the kernel).
# -----------------------------------------------------------------------------------
def _reference_conv_block(x, w, gamma, beta, *, stride, padding):
    sh, sw = _pair(stride)
    ph, pw = _pair(padding)
    y = jax.lax.conv_general_dilated(
        x.astype(jnp.bfloat16), w.astype(jnp.bfloat16),
        window_strides=(sh, sw),
        padding=[(ph, ph), (pw, pw)],
        dimension_numbers=("NCHW", "OIHW", "NCHW"),
        preferred_element_type=jnp.float32)
    mean = jnp.mean(y, axis=(0, 2, 3), keepdims=True)
    var = jnp.mean(jnp.square(y - mean), axis=(0, 2, 3), keepdims=True)   # biased
    y = (y - mean) * jax.lax.rsqrt(var + BN_EPS)
    y = y * gamma.reshape(1, -1, 1, 1) + beta.reshape(1, -1, 1, 1)
    return jnp.maximum(y, 0.0)


def _reference_max_pool(x):
    return jax.lax.reduce_window(x, -jnp.inf, jax.lax.max,
                                 (1, 1, 3, 3), (1, 1, 2, 2), "VALID")


def _make_convblock_params(key, cin, cout, kh, kw):
    kconv, kg, kb = jax.random.split(key, 3)
    w = jax.random.normal(kconv, (cout, cin, kh, kw), dtype=jnp.float32)
    w = w / (float(cin * kh * kw) ** 0.5)
    gamma = 1.0 + 0.1 * jax.random.normal(kg, (cout,), dtype=jnp.float32)
    beta = 0.1 * jax.random.normal(kb, (cout,), dtype=jnp.float32)
    return w, gamma, beta


if __name__ == "__main__":
    # Smallest-ish input that survives the whole stem: (2, 3, 35, 35) -> (2, 384, 2, 2).
    N, IN_CH, H, W = 2, 3, 35, 35

    defs = _stem_defs(IN_CH)
    keys = jax.random.split(jax.random.PRNGKey(0), len(defs) + 1)
    x = jax.random.normal(keys[0], (N, IN_CH, H, W), dtype=jnp.float32)
    params = {name: _make_convblock_params(k, *cfg)
              for (name, cfg), k in zip(defs.items(), keys[1:])}

    # Reference stem, recording each block's (input, output) so every Pallas kernel is
    # checked with identical inputs (isolates kernel numerics from the compounding
    # bf16 rounding divergence across the deep stack).
    records = []

    def rec_cb(inp, w, g, b, *, stride, padding):
        y = _reference_conv_block(inp, w, g, b, stride=stride, padding=padding)
        records.append(("conv", inp, (w, g, b), stride, padding, y))
        return y

    def rec_mp(inp):
        y = _reference_max_pool(inp)
        records.append(("pool", inp, None, None, None, y))
        return y

    ref_out = stem_forward(x, params, rec_cb, rec_mp)

    # Per-block validation of the Pallas kernels at every real intermediate shape.
    for kind, inp, wgb, stride, padding, ref_y in records:
        if kind == "conv":
            got = conv_block_forward(inp, *wgb, stride=stride, padding=padding)
        else:
            got = max_pool_3x3_s2(inp)
        got = jax.block_until_ready(got)
        assert got.shape == ref_y.shape, (kind, got.shape, ref_y.shape)
        err = float(jnp.max(jnp.abs(got.astype(jnp.float32) - ref_y)))
        assert err < 5e-2, (kind, err)     # bf16 block outputs vs f32 reference

    # Full InceptionStem forward through the Pallas kernels (bf16 end-to-end inside).
    out = pallas_stem_forward(x, params)
    out = jax.block_until_ready(out)
    assert out.shape == ref_out.shape == (N, 384, 2, 2), out.shape
    assert bool(jnp.all(jnp.isfinite(out)))
    num = jnp.sqrt(jnp.sum(jnp.square(out - ref_out)))
    den = jnp.sqrt(jnp.sum(jnp.square(ref_out))) + 1e-12
    rel = float(num / den)
    assert rel < 0.5, rel   # loose: bf16 rounding divergence compounds over ~10 layers

    print("KERNEL_OK")
</pallas_src>

<mosaic_0001>
module attributes {stable_mosaic.version = 11 : i64} {
  func.func @_bn_relu_kernel(%arg0: i32, %arg1: memref<304x128xbf16, #tpu.memory_space<vmem>>, %arg2: memref<1x128xf32, #tpu.memory_space<vmem>>, %arg3: memref<1x128xf32, #tpu.memory_space<vmem>>, %arg4: memref<304x128xbf16, #tpu.memory_space<vmem>>) attributes {dimension_semantics = [#tpu.dimension_semantics<parallel>], iteration_bounds = array<i64: 2>, scalar_prefetch = 0 : i64, scratch_operands = 0 : i64, tpu.core_type = #tpu.core_type<tc>, window_params = [{transform_indices = @transform_0, window_bounds = array<i64: 304, 128>}, {pipeline_mode = #tpu.pipeline_mode<synchronous>, transform_indices = @transform_1, window_bounds = array<i64: 1, 128>}, {pipeline_mode = #tpu.pipeline_mode<synchronous>, transform_indices = @transform_2, window_bounds = array<i64: 1, 128>}, {transform_indices = @transform_3, window_bounds = array<i64: 304, 128>}]} {
    %c0 = arith.constant 0 : index
    %c0_0 = arith.constant 0 : index
    %0 = vector.load %arg1[%c0, %c0_0] : memref<304x128xbf16, #tpu.memory_space<vmem>>, vector<304x128xbf16>
    %1 = arith.extf %0 : vector<304x128xbf16> to vector<304x128xf32>
    %c0_1 = arith.constant 0 : index
    %c0_2 = arith.constant 0 : index
    %2 = vector.load %arg2[%c0_1, %c0_2] : memref<1x128xf32, #tpu.memory_space<vmem>>, vector<1x128xf32>
    %3 = vector.broadcast %2 : vector<1x128xf32> to vector<304x128xf32>
    %4 = arith.mulf %1, %3 : vector<304x128xf32>
    %c0_3 = arith.constant 0 : index
    %c0_4 = arith.constant 0 : index
    %5 = vector.load %arg3[%c0_3, %c0_4] : memref<1x128xf32, #tpu.memory_space<vmem>>, vector<1x128xf32>
    %6 = vector.broadcast %5 : vector<1x128xf32> to vector<304x128xf32>
    %7 = arith.addf %4, %6 : vector<304x128xf32>
    %cst = arith.constant 0.000000e+00 : f32
    %8 = vector.broadcast %cst : f32 to vector<304x128xf32>
    %9 = arith.maximumf %7, %8 : vector<304x128xf32>
    %10 = arith.truncf %9 : vector<304x128xf32> to vector<304x128xbf16>
    %c0_5 = arith.constant 0 : index
    %c0_6 = arith.constant 0 : index
    %11 = vector.load %arg4[%c0_5, %c0_6] : memref<304x128xbf16, #tpu.memory_space<vmem>>, vector<304x128xbf16>
    tpu.vector_store %arg4[%c0_5, %c0_6], %10 {strides = array<i32>} : memref<304x128xbf16, #tpu.memory_space<vmem>>, vector<304x128xbf16>,
    return
  }
  func.func @transform_0(%arg0: i32) -> (i32, i32) {
    %c0_i32 = arith.constant 0 : i32
    %c0_i32_0 = arith.constant 0 : i32
    return %arg0, %c0_i32 : i32, i32
  }
  func.func @transform_1(%arg0: i32) -> (i32, i32) {
    %c0_i32 = arith.constant 0 : i32
    %c0_i32_0 = arith.constant 0 : i32
    %c0_i32_1 = arith.constant 0 : i32
    return %c0_i32, %c0_i32_0 : i32, i32
  }
  func.func @transform_2(%arg0: i32) -> (i32, i32) {
    %c0_i32 = arith.constant 0 : i32
    %c0_i32_0 = arith.constant 0 : i32
    %c0_i32_1 = arith.constant 0 : i32
    return %c0_i32, %c0_i32_0 : i32, i32
  }
  func.func @transform_3(%arg0: i32) -> (i32, i32) {
    %c0_i32 = arith.constant 0 : i32
    %c0_i32_0 = arith.constant 0 : i32
    return %arg0, %c0_i32 : i32, i32
  }
}

module attributes {stable_mosaic.version = 11 : i64} {
  func.func @_conv_stats_kernel(%arg0: i32, %arg1: memref<304x32xbf16, #tpu.memory_space<vmem>>, %arg2: memref<32x128xbf16, #tpu.memory_space<vmem>>, %arg3: memref<304x128xbf16, #tpu.memory_space<vmem>>, %arg4: memref<1x1x128xf32, #tpu.memory_space<vmem>>, %arg5: memref<1x1x128xf32, #tpu.memory_space<vmem>>) attributes {dimension_semantics = [#tpu.dimension_semantics<parallel>], iteration_bounds = array<i64: 2>, scalar_prefetch = 0 : i64, scratch_operands = 0 : i64, tpu.core_type = #tpu.core_type<tc>, window_params = [{transform_indices = @transform_0, window_bounds = array<i64: 304, 32>}, {pipeline_mode = #tpu.pipeline_mode<synchronous>, transform_indices = @transform_1, window_bounds = array<i64: 32, 128>}, {transform_indices = @transform_2, window_bounds = array<i64: 304, 128>}, {transform_indices = @transform_3, window_bounds = array<i64: 1, 1, 128>}, {transform_indices = @transform_4, window_bounds = array<i64: 1, 1, 128>}]} {
    %c0 = arith.constant 0 : index
    %c0_0 = arith.constant 0 : index
    %0 = vector.load %arg1[%c0, %c0_0] : memref<304x32xbf16, #tpu.memory_space<vmem>>, vector<304x32xbf16>
    %c0_1 = arith.constant 0 : index
    %c0_2 = arith.constant 0 : index
    %1 = vector.load %arg2[%c0_1, %c0_2] : memref<32x128xbf16, #tpu.memory_space<vmem>>, vector<32x128xbf16>
    %cst = arith.constant dense<0.000000e+00> : vector<304x128xf32>
    %2 = tpu.matmul %0, %1, %cst {dimension_numbers = #tpu.dot_dimension_numbers<[1], [0], [0], [1], [0, 0, 1, 1], [], []>} : vector<304x32xbf16>, vector<32x128xbf16>, vector<304x128xf32> -> vector<304x128xf32>
    %3 = arith.truncf %2 : vector<304x128xf32> to vector<304x128xbf16>
    %c0_3 = arith.constant 0 : index
    %c0_4 = arith.constant 0 : index
    %4 = vector.load %arg3[%c0_3, %c0_4] : memref<304x128xbf16, #tpu.memory_space<vmem>>, vector<304x128xbf16>
    tpu.vector_store %arg3[%c0_3, %c0_4], %3 {strides = array<i32>} : memref<304x128xbf16, #tpu.memory_space<vmem>>, vector<304x128xbf16>,
    %cst_5 = arith.constant dense<0.000000e+00> : vector<128xf32>
    %5 = vector.multi_reduction <add>, %2, %cst_5 [0] : vector<304x128xf32> to vector<128xf32>
    %6 = vector.shape_cast %5 : vector<128xf32> to vector<1x128xf32>
    %7 = vector.shape_cast %6 : vector<1x128xf32> to vector<1x1x128xf32>
    %c0_6 = arith.constant 0 : index
    %c0_7 = arith.constant 0 : index
    %c0_8 = arith.constant 0 : index
    %8 = vector.load %arg4[%c0_6, %c0_7, %c0_8] : memref<1x1x128xf32, #tpu.memory_space<vmem>>, vector<1x1x128xf32>
    tpu.vector_store %arg4[%c0_6, %c0_7, %c0_8], %7 {strides = array<i32>} : memref<1x1x128xf32, #tpu.memory_space<vmem>>, vector<1x1x128xf32>,
    %9 = arith.mulf %2, %2 : vector<304x128xf32>
    %cst_9 = arith.constant dense<0.000000e+00> : vector<128xf32>
    %10 = vector.multi_reduction <add>, %9, %cst_9 [0] : vector<304x128xf32> to vector<128xf32>
    %11 = vector.shape_cast %10 : vector<128xf32> to vector<1x128xf32>
    %12 = vector.shape_cast %11 : vector<1x128xf32> to vector<1x1x128xf32>
    %c0_10 = arith.constant 0 : index
    %c0_11 = arith.constant 0 : index
    %c0_12 = arith.constant 0 : index
    %13 = vector.load %arg5[%c0_10, %c0_11, %c0_12] : memref<1x1x128xf32, #tpu.memory_space<vmem>>, vector<1x1x128xf32>
    tpu.vector_store %arg5[%c0_10, %c0_11, %c0_12], %12 {strides = array<i32>} : memref<1x1x128xf32, #tpu.memory_space<vmem>>, vector<1x1x128xf32>,
    return
  }
  func.func @transform_0(%arg0: i32) -> (i32, i32) {
    %c0_i32 = arith.constant 0 : i32
    %c0_i32_0 = arith.constant 0 : i32
    return %arg0, %c0_i32 : i32, i32
  }
  func.func @transform_1(%arg0: i32) -> (i32, i32) {
    %c0_i32 = arith.constant 0 : i32
    %c0_i32_0 = arith.constant 0 : i32
    %c0_i32_1 = arith.constant 0 : i32
    return %c0_i32, %c0_i32_0 : i32, i32
  }
  func.func @transform_2(%arg0: i32) -> (i32, i32) {
    %c0_i32 = arith.constant 0 : i32
    %c0_i32_0 = arith.constant 0 : i32
    return %arg0, %c0_i32 : i32, i32
  }
  func.func @transform_3(%arg0: i32) -> (i32, i32, i32) {
    %c0_i32 = arith.constant 0 : i32
    %c0_i32_0 = arith.constant 0 : i32
    %c0_i32_1 = arith.constant 0 : i32
    return %arg0, %c0_i32, %c0_i32_0 : i32, i32, i32
  }
  func.func @transform_4(%arg0: i32) -> (i32, i32, i32) {
    %c0_i32 = arith.constant 0 : i32
    %c0_i32_0 = arith.constant 0 : i32
    %c0_i32_1 = arith.constant 0 : i32
    return %arg0, %c0_i32, %c0_i32_0 : i32, i32, i32
  }
}

</mosaic_0001>

<llo_original>
// kernel: conv_block_forward.3
$region0: #{conv_block_forward.3}
  #allocation0 [shape = 'u32[]', space=smem, size = 0x4, offset = 0x4, fixed_abs, tag = 'smem constant byte address 0x4 - core index']
  #allocation1 [shape = 'u32[144,128]{1,0:T(1,128)}', space=vmem, size = 0x12000, scoped, tag = 'internal scratch']
  %s0 = inlined_call_operand.vmem [shape: bf16[608,128], index: 0, kind: input, shape index: {}]
  %s1 = inlined_call_operand.vmem [shape: f32[1,128], index: 1, kind: input, shape index: {}]
  %s2 = inlined_call_operand.vmem [shape: f32[1,128], index: 2, kind: input, shape index: {}]
  %s3 = inlined_call_operand.vmem [shape: bf16[608,128], index: 3, kind: output, shape index: {}]
  %s4 = sld [smem:[#allocation0]]
  $region45: #{conv_block_forward.3} parent=0
    _
  %s6 = ssub.s32 1, %s4
  %s7 = scalar_select 0, %s6, %s4
  loop: start=0, step=1, limit=4
  $region2: #{conv_block_forward.3} parent=0 // loop_pre_header
    _
  $region3: #{conv_block_forward.3} parent=0 // loop_header
    %s9 = sphi 0, %s13
    %p10 = scmp.ge.s32.totalorder %s9, 4
    %s19 = sphi 0, %s21
    %s22 = sphi 0, %s19
    %s23 = sphi 0, %s22
    %s39 = sphi 0, %s23
    %s43 = sphi 0, %s43
    %s45 = sphi 0, %s43
    %s46 = sphi 0, %s45
    %s60 = sphi 0, %s46
    %s64 = sphi 0, %s64
    %s66 = sphi 0, %s64
    %s67 = sphi 0, %s66
    %s81 = sphi 0, %s67
    %s87 = sphi 0, %s89
    %s90 = sphi 0, %s87
    %s91 = sphi 0, %s90
    %s107 = sphi 0, %s91
  $region4: #{conv_block_forward.3} parent=0 // loop_header_branch
    %12 = sbr.rel (%p10) target = $region8
  $region5: #{conv_block_forward.3} parent=0 // loop_body
    %s14 = ssub.s32 %s9, 1
    %s15 = ssub.s32 %s9, 2
    %s16 = sadd.s32 %s9, 1
    %s17 = ssub.s32 %s9, %s16
    %p18 = scmp.eq.s32.totalorder %s17, 0
    %s20 = sadd.s32 %s19, 1
    %s21 = scalar_select %p18, %s19, %s20
    %p24 = pneg %p18
    %p25 = scmp.eq.s32.totalorder %s9, 1
    %p26 = por %p24, %p25
    %p27 = scmp.ne.s32.totalorder %s19, %s22
    %p28 = scmp.eq.s32.totalorder %s9, 0
    %p29 = por %p27, %p28
    %p30 = scmp.ne.s32.totalorder %s19, %s22
    %p31 = scmp.eq.s32.totalorder %s14, 1
    %p32 = por %p30, %p31
    %p33 = scmp.ne.s32.totalorder %s22, %s23
    %p34 = scmp.eq.s32.totalorder %s14, 0
    %p35 = por %p33, %p34
    %p36 = scmp.ne.s32.totalorder %s22, %s23
    %p37 = scmp.eq.s32.totalorder %s15, 1
    %p38 = por %p36, %p37
    %p40 = scmp.ne.s32.totalorder %s23, %s39
    %p41 = scmp.eq.s32.totalorder %s15, 0
    %p42 = por %p40, %p41
    %s44 = sadd.s32 %s43, 1
    %p47 = scmp.eq.s32.totalorder %s9, 1
    %p48 = scmp.ne.s32.totalorder %s43, %s45
    %p49 = scmp.eq.s32.totalorder %s9, 0
    %p50 = por %p48, %p49
    %p51 = scmp.ne.s32.totalorder %s43, %s45
    %p52 = scmp.eq.s32.totalorder %s14, 1
    %p53 = por %p51, %p52
    %p54 = scmp.ne.s32.totalorder %s45, %s46
    %p55 = scmp.eq.s32.totalorder %s14, 0
    %p56 = por %p54, %p55
    %p57 = scmp.ne.s32.totalorder %s45, %s46
    %p58 = scmp.eq.s32.totalorder %s15, 1
    %p59 = por %p57, %p58
    %p61 = scmp.ne.s32.totalorder %s46, %s60
    %p62 = scmp.eq.s32.totalorder %s15, 0
    %p63 = por %p61, %p62
    %s65 = sadd.s32 %s64, 1
    %p68 = scmp.eq.s32.totalorder %s9, 1
    %p69 = scmp.ne.s32.totalorder %s64, %s66
    %p70 = scmp.eq.s32.totalorder %s9, 0
    %p71 = por %p69, %p70
    %p72 = scmp.ne.s32.totalorder %s64, %s66
    %p73 = scmp.eq.s32.totalorder %s14, 1
    %p74 = por %p72, %p73
    %p75 = scmp.ne.s32.totalorder %s66, %s67
    %p76 = scmp.eq.s32.totalorder %s14, 0
    %p77 = por %p75, %p76
    %p78 = scmp.ne.s32.totalorder %s66, %s67
    %p79 = scmp.eq.s32.totalorder %s15, 1
    %p80 = por %p78, %p79
    %p82 = scmp.ne.s32.totalorder %s67, %s81
    %p83 = scmp.eq.s32.totalorder %s15, 0
    %p84 = por %p82, %p83
    %s85 = ssub.s32 %s9, %s16
    %p86 = scmp.eq.s32.totalorder %s85, 0
    %s88 = sadd.s32 %s87, 1
    %s89 = scalar_select %p86, %s87, %s88
    %p92 = pneg %p86
    %p93 = scmp.eq.s32.totalorder %s9, 1
    %p94 = por %p92, %p93
    %p95 = scmp.ne.s32.totalorder %s87, %s90
    %p96 = scmp.eq.s32.totalorder %s9, 0
    %p97 = por %p95, %p96
    %p98 = scmp.ne.s32.totalorder %s87, %s90
    %p99 = scmp.eq.s32.totalorder %s14, 1
    %p100 = por %p98, %p99
    %p101 = scmp.ne.s32.totalorder %s90, %s91
    %p102 = scmp.eq.s32.totalorder %s14, 0
    %p103 = por %p101, %p102
    %p104 = scmp.ne.s32.totalorder %s90, %s91
    %p105 = scmp.eq.s32.totalorder %s15, 1
    %p106 = por %p104, %p105
    %p108 = scmp.ne.s32.totalorder %s91, %s107
    %p109 = scmp.eq.s32.totalorder %s15, 0
    %p110 = por %p108, %p109
    %p111 = scmp.le.s32.totalorder 1, %s9
    %p112 = scmp.lt.s32.totalorder %s9, 3
    %p113 = pnand %p111, %p112
    %p114 = pneg %p113
    // Predicated region
    $region9: #{conv_block_forward.3} parent=5 // pred_check
      _
    $region10: #{conv_block_forward.3} parent=5 // pred_check_branch
      %116 = sbr.rel (%p113) target = $region12
    $region11: #{conv_block_forward.3} parent=5 // pred_region
      %s117 = ssub.s32 %s9, 1
      // Predicated region
      $region13: #{conv_block_forward.3} parent=11 // pred_check
        %p118 = pneg %p56
      $region14: #{conv_block_forward.3} parent=11 // pred_check_branch
        %120 = sbr.rel (%p118) target = $region16
      $region15: #{conv_block_forward.3} parent=11 // pred_region
        _
      $region16: #{conv_block_forward.3} parent=11 // pred_fallthru
        _
      // Predicated region
      $region17: #{conv_block_forward.3} parent=11 // pred_check
        %p121 = pneg %p77
      $region18: #{conv_block_forward.3} parent=11 // pred_check_branch
        %123 = sbr.rel (%p121) target = $region20
      $region19: #{conv_block_forward.3} parent=11 // pred_region
        _
      $region20: #{conv_block_forward.3} parent=11 // pred_fallthru
        _
    $region12: #{conv_block_forward.3} parent=5 // pred_fallthru
      _
    %p124 = scmp.lt.s32.totalorder %s9, 2
    // Predicated region
    $region21: #{conv_block_forward.3} parent=5 // pred_check
      %p125 = pneg %p124
    $region22: #{conv_block_forward.3} parent=5 // pred_check_branch
      %127 = sbr.rel (%p125) target = $region24
    $region23: #{conv_block_forward.3} parent=5 // pred_region
      // Predicated region
      $region25: #{conv_block_forward.3} parent=23 // pred_check
        %p128 = pneg %p29
      $region26: #{conv_block_forward.3} parent=23 // pred_check_branch
        %130 = sbr.rel (%p128) target = $region28
      $region27: #{conv_block_forward.3} parent=23 // pred_region
        %s131 = smul.u32 38, %s9
        %p132 = scmp.lt.s32.totalorder %s131, 75
        %s133 = scalar_select %p132, %s131, 75
        %s134 = smul.addr %s133, 4
        %s135 = scalar_lea.vmem %s0, %s134
        %s136 = smul.u32 38, %s9
      $region28: #{conv_block_forward.3} parent=23 // pred_fallthru
        _
    $region24: #{conv_block_forward.3} parent=5 // pred_fallthru
      _
    %p137 = scmp.le.s32.totalorder 1, %s9
    %p138 = scmp.lt.s32.totalorder %s9, 3
    %p139 = pnand %p137, %p138
    %p140 = pneg %p139
    // Predicated region
    $region29: #{conv_block_forward.3} parent=5 // pred_check
      _
    $region30: #{conv_block_forward.3} parent=5 // pred_check_branch
      %142 = sbr.rel (%p139) target = $region32
    $region31: #{conv_block_forward.3} parent=5 // pred_region
      %s143 = ssub.s32 %s9, 1
      %s144 = smul.u32 38, %s14
      %p145 = scmp.lt.s32.totalorder %s144, 75
      %s146 = scalar_select %p145, %s144, 75
      %s147 = smul.addr %s146, 4
      %s148 = scalar_lea.vmem %s0, %s147
      %p149 = pneg %p35
      %p150 = pneg %p32
      %p151 = pneg %p56
      %p152 = pneg %p53
      %p153 = pneg %p77
      %p154 = pneg %p74
      %p155 = pneg %p103
      %p156 = pneg %p100
      %s157 = smul.u32 38, %s14
      %p158 = scmp.lt.s32.totalorder %s157, 75
      %s159 = scalar_select %p158, %s157, 75
      %s160 = smul.addr %s159, 4
      %s161 = scalar_lea.vmem %s3, %s160
      %s162 = smul.u32 38, %s14
      %p163 = scmp.lt.s32.totalorder %s162, 75
      %s164 = scalar_select %p163, %s162, 75
      %s165 = smul.addr %s164, 4
      %s166 = scalar_lea.vmem %s0, %s165
      %s167 = smul.u32 38, %s14
      %s168 = smul.u32 38, %s14
      %p169 = scmp.lt.s32.totalorder %s168, 75
      %s170 = scalar_select %p169, %s168, 75
      %s171 = smul.addr %s170, 4
      %s172 = scalar_lea.vmem %s3, %s171
      %s173 = smul.u32 38, %s14
      %v174 = vld [vmem:[%s166] sm:$0xf]
      %v175 = vld [vmem:[%s166 + $0x4] sm:$0xf]
      %v176 = vld [vmem:[%s166 + $0x8] sm:$0xf]
      %v177 = vld [vmem:[%s166 + $0xc] sm:$0xf]
      %v178 = vld [vmem:[%s166 + $0x10] sm:$0xf]
      %v179 = vld [vmem:[%s166 + $0x14] sm:$0xf]
      %v180 = vld [vmem:[%s166 + $0x18] sm:$0xf]
      %v181 = vld [vmem:[%s166 + $0x1c] sm:$0xf]
      %v182 = vld [vmem:[%s166 + $0x20] sm:$0xf]
      %v183 = vld [vmem:[%s166 + $0x24] sm:$0xf]
      %v184 = vld [vmem:[%s166 + $0x28] sm:$0xf]
      %v185 = vld [vmem:[%s166 + $0x2c] sm:$0xf]
      %v186 = vld [vmem:[%s166 + $0x30] sm:$0xf]
      %v187 = vld [vmem:[%s166 + $0x34] sm:$0xf]
      %v188 = vld [vmem:[%s166 + $0x38] sm:$0xf]
      %v189 = vld [vmem:[%s166 + $0x3c] sm:$0xf]
      %v190 = vld [vmem:[%s166 + $0x40] sm:$0xf]
      %v191 = vld [vmem:[%s166 + $0x44] sm:$0xf]
      %v192 = vld [vmem:[%s166 + $0x48] sm:$0xf]
      %v193 = vld [vmem:[%s166 + $0x4c] sm:$0xf]
      %v194 = vld [vmem:[%s166 + $0x50] sm:$0xf]
      %v195 = vld [vmem:[%s166 + $0x54] sm:$0xf]
      %v196 = vld [vmem:[%s166 + $0x58] sm:$0xf]
      %v197 = vld [vmem:[%s166 + $0x5c] sm:$0xf]
      %v198 = vld [vmem:[%s166 + $0x60] sm:$0xf]
      %v199 = vld [vmem:[%s166 + $0x64] sm:$0xf]
      %v200 = vld [vmem:[%s166 + $0x68] sm:$0xf]
      %v201 = vld [vmem:[%s166 + $0x6c] sm:$0xf]
      %v202 = vld [vmem:[%s166 + $0x70] sm:$0xf]
      %v203 = vld [vmem:[%s166 + $0x74] sm:$0xf]
      %v204 = vld [vmem:[%s166 + $0x78] sm:$0xf]
      %v205 = vld [vmem:[%s166 + $0x7c] sm:$0xf]
      %v206 = vld [vmem:[%s166 + $0x80] sm:$0xf]
      %v207 = vld [vmem:[%s166 + $0x84] sm:$0xf]
      %v208 = vld [vmem:[%s166 + $0x88] sm:$0xf]
      %v209 = vld [vmem:[%s166 + $0x8c] sm:$0xf]
      %v210 = vld [vmem:[%s166 + $0x90] sm:$0xf]
      %v211 = vld [vmem:[%s166 + $0x94] sm:$0xf]
      %v212 = vunpack.c.l.bf16 %v174
      %v213 = vunpack.c.l.bf16 %v175
      %v214 = vunpack.c.l.bf16 %v176
      %v215 = vunpack.c.l.bf16 %v177
      %v216 = vunpack.c.l.bf16 %v178
      %v217 = vunpack.c.l.bf16 %v179
      %v218 = vunpack.c.l.bf16 %v180
      %v219 = vunpack.c.l.bf16 %v181
      %v220 = vunpack.c.l.bf16 %v182
      %v221 = vunpack.c.l.bf16 %v183
      %v222 = vunpack.c.l.bf16 %v184
      %v223 = vunpack.c.l.bf16 %v185
      %v224 = vunpack.c.l.bf16 %v186
      %v225 = vunpack.c.l.bf16 %v187
      %v226 = vunpack.c.l.bf16 %v188
      %v227 = vunpack.c.l.bf16 %v189
      %v228 = vunpack.c.l.bf16 %v190
      %v229 = vunpack.c.l.bf16 %v191
      %v230 = vunpack.c.l.bf16 %v192
      %v231 = vunpack.c.l.bf16 %v193
      %v232 = vunpack.c.l.bf16 %v194
      %v233 = vunpack.c.l.bf16 %v195
      %v234 = vunpack.c.l.bf16 %v196
      %v235 = vunpack.c.l.bf16 %v197
      %v236 = vunpack.c.l.bf16 %v198
      %v237 = vunpack.c.l.bf16 %v199
      %v238 = vunpack.c.l.bf16 %v200
      %v239 = vunpack.c.l.bf16 %v201
      %v240 = vunpack.c.l.bf16 %v202
      %v241 = vunpack.c.l.bf16 %v203
      %v242 = vunpack.c.l.bf16 %v204
      %v243 = vunpack.c.l.bf16 %v205
      %v244 = vunpack.c.l.bf16 %v206
      %v245 = vunpack.c.l.bf16 %v207
      %v246 = vunpack.c.l.bf16 %v208
      %v247 = vunpack.c.l.bf16 %v209
      %v248 = vunpack.c.l.bf16 %v210
      %v249 = vunpack.c.l.bf16 %v211
      %v250 = vld [vmem:[%s1] sm:$0x1]
      %v252 = vlaneseq
      %v253 = vshrl.u32 %v252, 7
      %v254 = vsub.s32 0, %v253
      %v255 = vrot.slane %v250, %v254
      %v257 = vmul.f32 %v212, %v255
      %v258 = vmul.f32 %v213, %v255
      %v259 = vmul.f32 %v214, %v255
      %v260 = vmul.f32 %v215, %v255
      %v261 = vmul.f32 %v216, %v255
      %v262 = vmul.f32 %v217, %v255
      %v263 = vmul.f32 %v218, %v255
      %v264 = vmul.f32 %v219, %v255
      %v265 = vmul.f32 %v220, %v255
      %v266 = vmul.f32 %v221, %v255
      %v267 = vmul.f32 %v222, %v255
      %v268 = vmul.f32 %v223, %v255
      %v269 = vmul.f32 %v224, %v255
      %v270 = vmul.f32 %v225, %v255
      %v271 = vmul.f32 %v226, %v255
      %v272 = vmul.f32 %v227, %v255
      %v273 = vmul.f32 %v228, %v255
      %v274 = vmul.f32 %v229, %v255
      %v275 = vmul.f32 %v230, %v255
      %v276 = vmul.f32 %v231, %v255
      %v277 = vmul.f32 %v232, %v255
      %v278 = vmul.f32 %v233, %v255
      %v279 = vmul.f32 %v234, %v255
      %v280 = vmul.f32 %v235, %v255
      %v281 = vmul.f32 %v236, %v255
      %v282 = vmul.f32 %v237, %v255
      %v283 = vmul.f32 %v238, %v255
      %v284 = vmul.f32 %v239, %v255
      %v285 = vmul.f32 %v240, %v255
      %v286 = vmul.f32 %v241, %v255
      %v287 = vmul.f32 %v242, %v255
      %v288 = vmul.f32 %v243, %v255
      %v289 = vmul.f32 %v244, %v255
      %v290 = vmul.f32 %v245, %v255
      %v291 = vmul.f32 %v246, %v255
      %v292 = vmul.f32 %v247, %v255
      %v293 = vmul.f32 %v248, %v255
      %v294 = vmul.f32 %v249, %v255
      %v295 = vld [vmem:[%s2] sm:$0x1]
      %v297 = vlaneseq
      %v298 = vshrl.u32 %v297, 7
      %v299 = vsub.s32 0, %v298
      %v300 = vrot.slane %v295, %v299
      %v302 = vadd.f32 %v257, %v300
      %v303 = vadd.f32 %v258, %v300
      %v304 = vadd.f32 %v259, %v300
      %v305 = vadd.f32 %v260, %v300
      %v306 = vadd.f32 %v261, %v300
      %v307 = vadd.f32 %v262, %v300
      %v308 = vadd.f32 %v263, %v300
      %v309 = vadd.f32 %v264, %v300
      %v310 = vadd.f32 %v265, %v300
      %v311 = vadd.f32 %v266, %v300
      %v312 = vadd.f32 %v267, %v300
      %v313 = vadd.f32 %v268, %v300
      %v314 = vadd.f32 %v269, %v300
      %v315 = vadd.f32 %v270, %v300
      %v316 = vadd.f32 %v271, %v300
      %v317 = vadd.f32 %v272, %v300
      %v318 = vadd.f32 %v273, %v300
      %v319 = vadd.f32 %v274, %v300
      %v320 = vadd.f32 %v275, %v300
      %v321 = vadd.f32 %v276, %v300
      %v322 = vadd.f32 %v277, %v300
      %v323 = vadd.f32 %v278, %v300
      %v324 = vadd.f32 %v279, %v300
      %v325 = vadd.f32 %v280, %v300
      %v326 = vadd.f32 %v281, %v300
      %v327 = vadd.f32 %v282, %v300
      %v328 = vadd.f32 %v283, %v300
      %v329 = vadd.f32 %v284, %v300
      %v330 = vadd.f32 %v285, %v300
      %v331 = vadd.f32 %v286, %v300
      %v332 = vadd.f32 %v287, %v300
      %v333 = vadd.f32 %v288, %v300
      %v334 = vadd.f32 %v289, %v300
      %v335 = vadd.f32 %v290, %v300
      %v336 = vadd.f32 %v291, %v300
      %v337 = vadd.f32 %v292, %v300
      %v338 = vadd.f32 %v293, %v300
      %v339 = vadd.f32 %v294, %v300
      %v340 = vmax.f32 %v302, 0.0
      %v341 = vmax.f32 %v303, 0.0
      %v342 = vmax.f32 %v304, 0.0
      %v343 = vmax.f32 %v305, 0.0
      %v344 = vmax.f32 %v306, 0.0
      %v345 = vmax.f32 %v307, 0.0
      %v346 = vmax.f32 %v308, 0.0
      %v347 = vmax.f32 %v309, 0.0
      %v348 = vmax.f32 %v310, 0.0
      %v349 = vmax.f32 %v311, 0.0
      %v350 = vmax.f32 %v312, 0.0
      %v351 = vmax.f32 %v313, 0.0
      %v352 = vmax.f32 %v314, 0.0
      %v353 = vmax.f32 %v315, 0.0
      %v354 = vmax.f32 %v316, 0.0
      %v355 = vmax.f32 %v317, 0.0
      %v356 = vmax.f32 %v318, 0.0
      %v357 = vmax.f32 %v319, 0.0
      %v358 = vmax.f32 %v320, 0.0
      %v359 = vmax.f32 %v321, 0.0
      %v360 = vmax.f32 %v322, 0.0
      %v361 = vmax.f32 %v323, 0.0
      %v362 = vmax.f32 %v324, 0.0
      %v363 = vmax.f32 %v325, 0.0
      %v364 = vmax.f32 %v326, 0.0
      %v365 = vmax.f32 %v327, 0.0
      %v366 = vmax.f32 %v328, 0.0
      %v367 = vmax.f32 %v329, 0.0
      %v368 = vmax.f32 %v330, 0.0
      %v369 = vmax.f32 %v331, 0.0
      %v370 = vmax.f32 %v332, 0.0
      %v371 = vmax.f32 %v333, 0.0
      %v372 = vmax.f32 %v334, 0.0
      %v373 = vmax.f32 %v335, 0.0
      %v374 = vmax.f32 %v336, 0.0
      %v375 = vmax.f32 %v337, 0.0
      %v376 = vmax.f32 %v338, 0.0
      %v377 = vmax.f32 %v339, 0.0
      %v378 = vpack.c.bf16 %v341, %v340
      %v379 = vpack.c.bf16 %v343, %v342
      %v380 = vpack.c.bf16 %v345, %v344
      %v381 = vpack.c.bf16 %v347, %v346
      %v382 = vpack.c.bf16 %v349, %v348
      %v383 = vpack.c.bf16 %v351, %v350
      %v384 = vpack.c.bf16 %v353, %v352
      %v385 = vpack.c.bf16 %v355, %v354
      %v386 = vpack.c.bf16 %v357, %v356
      %v387 = vpack.c.bf16 %v359, %v358
      %v388 = vpack.c.bf16 %v361, %v360
      %v389 = vpack.c.bf16 %v363, %v362
      %v390 = vpack.c.bf16 %v365, %v364
      %v391 = vpack.c.bf16 %v367, %v366
      %v392 = vpack.c.bf16 %v369, %v368
      %v393 = vpack.c.bf16 %v371, %v370
      %v394 = vpack.c.bf16 %v373, %v372
      %v395 = vpack.c.bf16 %v375, %v374
      %v396 = vpack.c.bf16 %v377, %v376
      %v416 = vunpack.c.l.b16 %v378
      %v417 = vunpack.c.h.b16 %v378
      %v418 = vunpack.c.l.b16 %v379
      %v419 = vunpack.c.h.b16 %v379
      %v420 = vunpack.c.l.b16 %v380
      %v421 = vunpack.c.h.b16 %v380
      %v422 = vunpack.c.l.b16 %v381
      %v423 = vunpack.c.h.b16 %v381
      %v424 = vunpack.c.l.b16 %v382
      %v425 = vunpack.c.h.b16 %v382
      %v426 = vunpack.c.l.b16 %v383
      %v427 = vunpack.c.h.b16 %v383
      %v428 = vunpack.c.l.b16 %v384
      %v429 = vunpack.c.h.b16 %v384
      %v430 = vunpack.c.l.b16 %v385
      %v431 = vunpack.c.h.b16 %v385
      %v432 = vunpack.c.l.b16 %v386
      %v433 = vunpack.c.h.b16 %v386
      %v434 = vunpack.c.l.b16 %v387
      %v435 = vunpack.c.h.b16 %v387
      %v436 = vunpack.c.l.b16 %v388
      %v437 = vunpack.c.h.b16 %v388
      %v438 = vunpack.c.l.b16 %v389
      %v439 = vunpack.c.h.b16 %v389
      %v440 = vunpack.c.l.b16 %v390
      %v441 = vunpack.c.h.b16 %v390
      %v442 = vunpack.c.l.b16 %v391
      %v443 = vunpack.c.h.b16 %v391
      %v444 = vunpack.c.l.b16 %v392
      %v445 = vunpack.c.h.b16 %v392
      %v446 = vunpack.c.l.b16 %v393
      %v447 = vunpack.c.h.b16 %v393
      %v448 = vunpack.c.l.b16 %v394
      %v449 = vunpack.c.h.b16 %v394
      %v450 = vunpack.c.l.b16 %v395
      %v451 = vunpack.c.h.b16 %v395
      %v452 = vunpack.c.l.b16 %v396
      %v453 = vunpack.c.h.b16 %v396
      %v454 = vpack.c.b16 %v416, %v416
      %v455 = vpack.c.b16 %v417, %v417
      %v456 = vpack.c.b16 %v418, %v418
      %v457 = vpack.c.b16 %v419, %v419
      %v458 = vpack.c.b16 %v420, %v420
      %v459 = vpack.c.b16 %v421, %v421
      %v460 = vpack.c.b16 %v422, %v422
      %v461 = vpack.c.b16 %v423, %v423
      %v462 = vpack.c.b16 %v424, %v424
      %v463 = vpack.c.b16 %v425, %v425
      %v464 = vpack.c.b16 %v426, %v426
      %v465 = vpack.c.b16 %v427, %v427
      %v466 = vpack.c.b16 %v428, %v428
      %v467 = vpack.c.b16 %v429, %v429
      %v468 = vpack.c.b16 %v430, %v430
      %v469 = vpack.c.b16 %v431, %v431
      %v470 = vpack.c.b16 %v432, %v432
      %v471 = vpack.c.b16 %v433, %v433
      %v472 = vpack.c.b16 %v434, %v434
      %v473 = vpack.c.b16 %v435, %v435
      %v474 = vpack.c.b16 %v436, %v436
      %v475 = vpack.c.b16 %v437, %v437
      %v476 = vpack.c.b16 %v438, %v438
      %v477 = vpack.c.b16 %v439, %v439
      %v478 = vpack.c.b16 %v440, %v440
      %v479 = vpack.c.b16 %v441, %v441
      %v480 = vpack.c.b16 %v442, %v442
      %v481 = vpack.c.b16 %v443, %v443
      %v482 = vpack.c.b16 %v444, %v444
      %v483 = vpack.c.b16 %v445, %v445
      %v484 = vpack.c.b16 %v446, %v446
      %v485 = vpack.c.b16 %v447, %v447
      %v486 = vpack.c.b16 %v448, %v448
      %v487 = vpack.c.b16 %v449, %v449
      %v488 = vpack.c.b16 %v450, %v450
      %v489 = vpack.c.b16 %v451, %v451
      %v490 = vpack.c.b16 %v452, %v452
      %v491 = vpack.c.b16 %v453, %v453
      %530 = vst [vmem:[%s172] sm:$0xf] %v454
      %531 = vst [vmem:[%s172 + $0x4] sm:$0xf] %v455
      %532 = vst [vmem:[%s172 + $0x8] sm:$0xf] %v456
      %533 = vst [vmem:[%s172 + $0xc] sm:$0xf] %v457
      %534 = vst [vmem:[%s172 + $0x10] sm:$0xf] %v458
      %535 = vst [vmem:[%s172 + $0x14] sm:$0xf] %v459
      %536 = vst [vmem:[%s172 + $0x18] sm:$0xf] %v460
      %537 = vst [vmem:[%s172 + $0x1c] sm:$0xf] %v461
      %538 = vst [vmem:[%s172 + $0x20] sm:$0xf] %v462
      %539 = vst [vmem:[%s172 + $0x24] sm:$0xf] %v463
      %540 = vst [vmem:[%s172 + $0x28] sm:$0xf] %v464
      %541 = vst [vmem:[%s172 + $0x2c] sm:$0xf] %v465
      %542 = vst [vmem:[%s172 + $0x30] sm:$0xf] %v466
      %543 = vst [vmem:[%s172 + $0x34] sm:$0xf] %v467
      %544 = vst [vmem:[%s172 + $0x38] sm:$0xf] %v468
      %545 = vst [vmem:[%s172 + $0x3c] sm:$0xf] %v469
      %546 = vst [vmem:[%s172 + $0x40] sm:$0xf] %v470
      %547 = vst [vmem:[%s172 + $0x44] sm:$0xf] %v471
      %548 = vst [vmem:[%s172 + $0x48] sm:$0xf] %v472
      %549 = vst [vmem:[%s172 + $0x4c] sm:$0xf] %v473
      %550 = vst [vmem:[%s172 + $0x50] sm:$0xf] %v474
      %551 = vst [vmem:[%s172 + $0x54] sm:$0xf] %v475
      %552 = vst [vmem:[%s172 + $0x58] sm:$0xf] %v476
      %553 = vst [vmem:[%s172 + $0x5c] sm:$0xf] %v477
      %554 = vst [vmem:[%s172 + $0x60] sm:$0xf] %v478
      %555 = vst [vmem:[%s172 + $0x64] sm:$0xf] %v479
      %556 = vst [vmem:[%s172 + $0x68] sm:$0xf] %v480
      %557 = vst [vmem:[%s172 + $0x6c] sm:$0xf] %v481
      %558 = vst [vmem:[%s172 + $0x70] sm:$0xf] %v482
      %559 = vst [vmem:[%s172 + $0x74] sm:$0xf] %v483
      %560 = vst [vmem:[%s172 + $0x78] sm:$0xf] %v484
      %561 = vst [vmem:[%s172 + $0x7c] sm:$0xf] %v485
      %562 = vst [vmem:[%s172 + $0x80] sm:$0xf] %v486
      %563 = vst [vmem:[%s172 + $0x84] sm:$0xf] %v487
      %564 = vst [vmem:[%s172 + $0x88] sm:$0xf] %v488
      %565 = vst [vmem:[%s172 + $0x8c] sm:$0xf] %v489
      %566 = vst [vmem:[%s172 + $0x90] sm:$0xf] %v490
      %567 = vst [vmem:[%s172 + $0x94] sm:$0xf] %v491
      %s568 = smul.u32 38, %s14
      %p569 = scmp.lt.s32.totalorder %s568, 75
      %s570 = scalar_select %p569, %s568, 75
      %s571 = smul.addr %s570, 4
      %s572 = scalar_lea.vmem %s3, %s571
      // Predicated region
      $region33: #{conv_block_forward.3} parent=31 // pred_check
        %p573 = pneg %p100
      $region34: #{conv_block_forward.3} parent=31 // pred_check_branch
        %575 = sbr.rel (%p573) target = $region36
      $region35: #{conv_block_forward.3} parent=31 // pred_region
        %s576 = smul.u32 38, %s14
      $region36: #{conv_block_forward.3} parent=31 // pred_fallthru
        _
    $region32: #{conv_block_forward.3} parent=5 // pred_fallthru
      _
    %p577 = scmp.le.s32.totalorder 2, %s9
    // Predicated region
    $region37: #{conv_block_forward.3} parent=5 // pred_check
      %p578 = pneg %p577
    $region38: #{conv_block_forward.3} parent=5 // pred_check_branch
      %580 = sbr.rel (%p578) target = $region40
    $region39: #{conv_block_forward.3} parent=5 // pred_region
      %s581 = ssub.s32 %s9, 2
      // Predicated region
      $region41: #{conv_block_forward.3} parent=39 // pred_check
        %p582 = pneg %p106
      $region42: #{conv_block_forward.3} parent=39 // pred_check_branch
        %584 = sbr.rel (%p582) target = $region44
      $region43: #{conv_block_forward.3} parent=39 // pred_region
        %s585 = smul.u32 38, %s15
        %p586 = scmp.lt.s32.totalorder %s585, 75
        %s587 = scalar_select %p586, %s585, 75
        %s588 = smul.addr %s587, 4
        %s589 = scalar_lea.vmem %s3, %s588
      $region44: #{conv_block_forward.3} parent=39 // pred_fallthru
        _
    $region40: #{conv_block_forward.3} parent=5 // pred_fallthru
      _
  $region6: #{conv_block_forward.3} parent=0 // loop_footer
    %s13 = sadd.s32 1, %s9
  $region7: #{conv_block_forward.3} parent=0 // loop_footer_branch
    %8 = sbr.rel target = $region3
  $region8: #{conv_block_forward.3} parent=0 // loop_exit
    _

// kernel: conv_block_forward.2
$region0: #{conv_block_forward.2}
  #allocation0 [shape = 'u32[]', space=smem, size = 0x4, offset = 0x4, fixed_abs, tag = 'smem constant byte address 0x4 - core index']
  #allocation1 [shape = 'u32[144,128]{1,0:T(1,128)}', space=vmem, size = 0x12000, scoped, tag = 'internal scratch']
  %s0 = inlined_call_operand.vmem [shape: bf16[608,32], index: 0, kind: input, shape index: {}]
  %s1 = inlined_call_operand.vmem [shape: bf16[32,128], index: 1, kind: input, shape index: {}]
  %s2 = inlined_call_operand.vmem [shape: bf16[608,128], index: 2, kind: output, shape index: {0}]
  %s3 = inlined_call_operand.vmem [shape: f32[2,1,128], index: 3, kind: output, shape index: {1}]
  %s4 = inlined_call_operand.vmem [shape: f32[2,1,128], index: 4, kind: output, shape index: {2}]
  %5 = xla_tuple %s2, %s3, %s4
  %s6 = sld [smem:[#allocation0]]
  $region57: #{conv_block_forward.2} parent=0
    _
  %s8 = ssub.s32 1, %s6
  %s9 = scalar_select 0, %s8, %s6
  loop: start=0, step=1, limit=4
  $region2: #{conv_block_forward.2} parent=0 // loop_pre_header
    _
  $region3: #{conv_block_forward.2} parent=0 // loop_header
    %s11 = sphi 0, %s15
    %p12 = scmp.ge.s32.totalorder %s11, 4
    %s21 = sphi 0, %s23
    %s24 = sphi 0, %s21
    %s25 = sphi 0, %s24
    %s41 = sphi 0, %s25
    %s45 = sphi 0, %s45
    %s47 = sphi 0, %s45
    %s48 = sphi 0, %s47
    %s62 = sphi 0, %s48
    %s68 = sphi 0, %s70
    %s71 = sphi 0, %s68
    %s72 = sphi 0, %s71
    %s88 = sphi 0, %s72
    %s94 = sphi 0, %s96
    %s97 = sphi 0, %s94
    %s98 = sphi 0, %s97
    %s114 = sphi 0, %s98
    %s120 = sphi 0, %s122
    %s123 = sphi 0, %s120
    %s124 = sphi 0, %s123
    %s140 = sphi 0, %s124
  $region4: #{conv_block_forward.2} parent=0 // loop_header_branch
    %14 = sbr.rel (%p12) target = $region8
  $region5: #{conv_block_forward.2} parent=0 // loop_body
    %s16 = ssub.s32 %s11, 1
    %s17 = ssub.s32 %s11, 2
    %s18 = sadd.s32 %s11, 1
    %s19 = ssub.s32 %s11, %s18
    %p20 = scmp.eq.s32.totalorder %s19, 0
    %s22 = sadd.s32 %s21, 1
    %s23 = scalar_select %p20, %s21, %s22
    %p26 = pneg %p20
    %p27 = scmp.eq.s32.totalorder %s11, 1
    %p28 = por %p26, %p27
    %p29 = scmp.ne.s32.totalorder %s21, %s24
    %p30 = scmp.eq.s32.totalorder %s11, 0
    %p31 = por %p29, %p30
    %p32 = scmp.ne.s32.totalorder %s21, %s24
    %p33 = scmp.eq.s32.totalorder %s16, 1
    %p34 = por %p32, %p33
    %p35 = scmp.ne.s32.totalorder %s24, %s25
    %p36 = scmp.eq.s32.totalorder %s16, 0
    %p37 = por %p35, %p36
    %p38 = scmp.ne.s32.totalorder %s24, %s25
    %p39 = scmp.eq.s32.totalorder %s17, 1
    %p40 = por %p38, %p39
    %p42 = scmp.ne.s32.totalorder %s25, %s41
    %p43 = scmp.eq.s32.totalorder %s17, 0
    %p44 = por %p42, %p43
    %s46 = sadd.s32 %s45, 1
    %p49 = scmp.eq.s32.totalorder %s11, 1
    %p50 = scmp.ne.s32.totalorder %s45, %s47
    %p51 = scmp.eq.s32.totalorder %s11, 0
    %p52 = por %p50, %p51
    %p53 = scmp.ne.s32.totalorder %s45, %s47
    %p54 = scmp.eq.s32.totalorder %s16, 1
    %p55 = por %p53, %p54
    %p56 = scmp.ne.s32.totalorder %s47, %s48
    %p57 = scmp.eq.s32.totalorder %s16, 0
    %p58 = por %p56, %p57
    %p59 = scmp.ne.s32.totalorder %s47, %s48
    %p60 = scmp.eq.s32.totalorder %s17, 1
    %p61 = por %p59, %p60
    %p63 = scmp.ne.s32.totalorder %s48, %s62
    %p64 = scmp.eq.s32.totalorder %s17, 0
    %p65 = por %p63, %p64
    %s66 = ssub.s32 %s11, %s18
    %p67 = scmp.eq.s32.totalorder %s66, 0
    %s69 = sadd.s32 %s68, 1
    %s70 = scalar_select %p67, %s68, %s69
    %p73 = pneg %p67
    %p74 = scmp.eq.s32.totalorder %s11, 1
    %p75 = por %p73, %p74
    %p76 = scmp.ne.s32.totalorder %s68, %s71
    %p77 = scmp.eq.s32.totalorder %s11, 0
    %p78 = por %p76, %p77
    %p79 = scmp.ne.s32.totalorder %s68, %s71
    %p80 = scmp.eq.s32.totalorder %s16, 1
    %p81 = por %p79, %p80
    %p82 = scmp.ne.s32.totalorder %s71, %s72
    %p83 = scmp.eq.s32.totalorder %s16, 0
    %p84 = por %p82, %p83
    %p85 = scmp.ne.s32.totalorder %s71, %s72
    %p86 = scmp.eq.s32.totalorder %s17, 1
    %p87 = por %p85, %p86
    %p89 = scmp.ne.s32.totalorder %s72, %s88
    %p90 = scmp.eq.s32.totalorder %s17, 0
    %p91 = por %p89, %p90
    %s92 = ssub.s32 %s11, %s18
    %p93 = scmp.eq.s32.totalorder %s92, 0
    %s95 = sadd.s32 %s94, 1
    %s96 = scalar_select %p93, %s94, %s95
    %p99 = pneg %p93
    %p100 = scmp.eq.s32.totalorder %s11, 1
    %p101 = por %p99, %p100
    %p102 = scmp.ne.s32.totalorder %s94, %s97
    %p103 = scmp.eq.s32.totalorder %s11, 0
    %p104 = por %p102, %p103
    %p105 = scmp.ne.s32.totalorder %s94, %s97
    %p106 = scmp.eq.s32.totalorder %s16, 1
    %p107 = por %p105, %p106
    %p108 = scmp.ne.s32.totalorder %s97, %s98
    %p109 = scmp.eq.s32.totalorder %s16, 0
    %p110 = por %p108, %p109
    %p111 = scmp.ne.s32.totalorder %s97, %s98
    %p112 = scmp.eq.s32.totalorder %s17, 1
    %p113 = por %p111, %p112
    %p115 = scmp.ne.s32.totalorder %s98, %s114
    %p116 = scmp.eq.s32.totalorder %s17, 0
    %p117 = por %p115, %p116
    %s118 = ssub.s32 %s11, %s18
    %p119 = scmp.eq.s32.totalorder %s118, 0
    %s121 = sadd.s32 %s120, 1
    %s122 = scalar_select %p119, %s120, %s121
    %p125 = pneg %p119
    %p126 = scmp.eq.s32.totalorder %s11, 1
    %p127 = por %p125, %p126
    %p128 = scmp.ne.s32.totalorder %s120, %s123
    %p129 = scmp.eq.s32.totalorder %s11, 0
    %p130 = por %p128, %p129
    %p131 = scmp.ne.s32.totalorder %s120, %s123
    %p132 = scmp.eq.s32.totalorder %s16, 1
    %p133 = por %p131, %p132
    %p134 = scmp.ne.s32.totalorder %s123, %s124
    %p135 = scmp.eq.s32.totalorder %s16, 0
    %p136 = por %p134, %p135
    %p137 = scmp.ne.s32.totalorder %s123, %s124
    %p138 = scmp.eq.s32.totalorder %s17, 1
    %p139 = por %p137, %p138
    %p141 = scmp.ne.s32.totalorder %s124, %s140
    %p142 = scmp.eq.s32.totalorder %s17, 0
    %p143 = por %p141, %p142
    %p144 = scmp.le.s32.totalorder 1, %s11
    %p145 = scmp.lt.s32.totalorder %s11, 3
    %p146 = pnand %p144, %p145
    %p147 = pneg %p146
    // Predicated region
    $region9: #{conv_block_forward.2} parent=5 // pred_check
      _
    $region10: #{conv_block_forward.2} parent=5 // pred_check_branch
      %149 = sbr.rel (%p146) target = $region12
    $region11: #{conv_block_forward.2} parent=5 // pred_region
      %s150 = ssub.s32 %s11, 1
      // Predicated region
      $region13: #{conv_block_forward.2} parent=11 // pred_check
        %p151 = pneg %p58
      $region14: #{conv_block_forward.2} parent=11 // pred_check_branch
        %153 = sbr.rel (%p151) target = $region16
      $region15: #{conv_block_forward.2} parent=11 // pred_region
        _
      $region16: #{conv_block_forward.2} parent=11 // pred_fallthru
        _
    $region12: #{conv_block_forward.2} parent=5 // pred_fallthru
      _
    %p154 = scmp.lt.s32.totalorder %s11, 2
    // Predicated region
    $region17: #{conv_block_forward.2} parent=5 // pred_check
      %p155 = pneg %p154
    $region18: #{conv_block_forward.2} parent=5 // pred_check_branch
      %157 = sbr.rel (%p155) target = $region20
    $region19: #{conv_block_forward.2} parent=5 // pred_region
      // Predicated region
      $region21: #{conv_block_forward.2} parent=19 // pred_check
        %p158 = pneg %p31
      $region22: #{conv_block_forward.2} parent=19 // pred_check_branch
        %160 = sbr.rel (%p158) target = $region24
      $region23: #{conv_block_forward.2} parent=19 // pred_region
        %s161 = smul.u32 38, %s11
        %p162 = scmp.lt.s32.totalorder %s161, 75
        %s163 = scalar_select %p162, %s161, 75
        %s164 = smul.addr %s163, 4
        %s165 = scalar_lea.vmem %s0, %s164
        %s166 = smul.u32 38, %s11
      $region24: #{conv_block_forward.2} parent=19 // pred_fallthru
        _
    $region20: #{conv_block_forward.2} parent=5 // pred_fallthru
      _
    %p167 = scmp.le.s32.totalorder 1, %s11
    %p168 = scmp.lt.s32.totalorder %s11, 3
    %p169 = pnand %p167, %p168
    %p170 = pneg %p169
    // Predicated region
    $region25: #{conv_block_forward.2} parent=5 // pred_check
      _
    $region26: #{conv_block_forward.2} parent=5 // pred_check_branch
      %172 = sbr.rel (%p169) target = $region28
    $region27: #{conv_block_forward.2} parent=5 // pred_region
      %s173 = ssub.s32 %s11, 1
      %s174 = smul.u32 38, %s16
      %p175 = scmp.lt.s32.totalorder %s174, 75
      %s176 = scalar_select %p175, %s174, 75
      %s177 = smul.addr %s176, 4
      %s178 = scalar_lea.vmem %s0, %s177
      %p179 = pneg %p37
      %p180 = pneg %p34
      %p181 = pneg %p58
      %p182 = pneg %p55
      %p183 = pneg %p84
      %p184 = pneg %p81
      %s185 = smul.u32 38, %s16
      %p186 = scmp.lt.s32.totalorder %s185, 75
      %s187 = scalar_select %p186, %s185, 75
      %s188 = smul.addr %s187, 4
      %s189 = scalar_lea.vmem %s2, %s188
      %p190 = pneg %p110
      %p191 = pneg %p107
      %p192 = scmp.lt.s32.totalorder %s16, 1
      %s193 = scalar_select %p192, %s16, 1
      %s194 = scalar_lea.vmem %s3, %s193
      %p195 = pneg %p136
      %p196 = pneg %p133
      %p197 = scmp.lt.s32.totalorder %s16, 1
      %s198 = scalar_select %p197, %s16, 1
      %s199 = scalar_lea.vmem %s4, %s198
      %s200 = smul.u32 38, %s16
      %p201 = scmp.lt.s32.totalorder %s200, 75
      %s202 = scalar_select %p201, %s200, 75
      %s203 = smul.addr %s202, 4
      %s204 = scalar_lea.vmem %s0, %s203
      %s205 = smul.u32 38, %s16
      %s206 = smul.u32 38, %s16
      %p207 = scmp.lt.s32.totalorder %s206, 75
      %s208 = scalar_select %p207, %s206, 75
      %s209 = smul.addr %s208, 4
      %s210 = scalar_lea.vmem %s2, %s209
      %s211 = smul.u32 38, %s16
      %p212 = scmp.lt.s32.totalorder %s16, 1
      %s213 = scalar_select %p212, %s16, 1
      %s214 = scalar_lea.vmem %s3, %s213
      %p215 = scmp.lt.s32.totalorder %s16, 1
      %s216 = scalar_select %p215, %s16, 1
      %s217 = scalar_lea.vmem %s4, %s216
      %v219 = vld [vmem:[%s204] sm:$0xf]
      %v220 = vld [vmem:[%s204 + $0x4] sm:$0xf]
      %v221 = vld [vmem:[%s204 + $0x8] sm:$0xf]
      %v222 = vld [vmem:[%s204 + $0xc] sm:$0xf]
      %v223 = vld [vmem:[%s204 + $0x10] sm:$0xf]
      %v224 = vld [vmem:[%s204 + $0x14] sm:$0xf]
      %v225 = vld [vmem:[%s204 + $0x18] sm:$0xf]
      %v226 = vld [vmem:[%s204 + $0x1c] sm:$0xf]
      %v227 = vld [vmem:[%s204 + $0x20] sm:$0xf]
      %v228 = vld [vmem:[%s204 + $0x24] sm:$0xf]
      %v229 = vld [vmem:[%s204 + $0x28] sm:$0xf]
      %v230 = vld [vmem:[%s204 + $0x2c] sm:$0xf]
      %v231 = vld [vmem:[%s204 + $0x30] sm:$0xf]
      %v232 = vld [vmem:[%s204 + $0x34] sm:$0xf]
      %v233 = vld [vmem:[%s204 + $0x38] sm:$0xf]
      %v234 = vld [vmem:[%s204 + $0x3c] sm:$0xf]
      %v235 = vld [vmem:[%s204 + $0x40] sm:$0xf]
      %v236 = vld [vmem:[%s204 + $0x44] sm:$0xf]
      %v237 = vld [vmem:[%s204 + $0x48] sm:$0xf]
      %v238 = vld [vmem:[%s204 + $0x4c] sm:$0xf]
      %v239 = vld [vmem:[%s204 + $0x50] sm:$0xf]
      %v240 = vld [vmem:[%s204 + $0x54] sm:$0xf]
      %v241 = vld [vmem:[%s204 + $0x58] sm:$0xf]
      %v242 = vld [vmem:[%s204 + $0x5c] sm:$0xf]
      %v243 = vld [vmem:[%s204 + $0x60] sm:$0xf]
      %v244 = vld [vmem:[%s204 + $0x64] sm:$0xf]
      %v245 = vld [vmem:[%s204 + $0x68] sm:$0xf]
      %v246 = vld [vmem:[%s204 + $0x6c] sm:$0xf]
      %v247 = vld [vmem:[%s204 + $0x70] sm:$0xf]
      %v248 = vld [vmem:[%s204 + $0x74] sm:$0xf]
      %v249 = vld [vmem:[%s204 + $0x78] sm:$0xf]
      %v250 = vld [vmem:[%s204 + $0x7c] sm:$0xf]
      %v251 = vld [vmem:[%s204 + $0x80] sm:$0xf]
      %v252 = vld [vmem:[%s204 + $0x84] sm:$0xf]
      %v253 = vld [vmem:[%s204 + $0x88] sm:$0xf]
      %v254 = vld [vmem:[%s204 + $0x8c] sm:$0xf]
      %v255 = vld [vmem:[%s204 + $0x90] sm:$0xf]
      %v256 = vld [vmem:[%s204 + $0x94] sm:$0xf]
      %v257 = vld [vmem:[%s1] sm:$0xf]
      %v258 = vld [vmem:[%s1 + $0x4] sm:$0xf]
      %v259 = vld [vmem:[%s1 + $0x8] sm:$0xf]
      %v260 = vld [vmem:[%s1 + $0xc] sm:$0xf]
      %v299 = vunpack.c.l.b16 %v219
      %v300 = vunpack.c.l.b16 %v220
      %v301 = vunpack.c.l.b16 %v221
      %v302 = vunpack.c.l.b16 %v222
      %v303 = vunpack.c.l.b16 %v223
      %v304 = vunpack.c.l.b16 %v224
      %v305 = vunpack.c.l.b16 %v225
      %v306 = vunpack.c.l.b16 %v226
      %v307 = vunpack.c.l.b16 %v227
      %v308 = vunpack.c.l.b16 %v228
      %v309 = vunpack.c.l.b16 %v229
      %v310 = vunpack.c.l.b16 %v230
      %v311 = vunpack.c.l.b16 %v231
      %v312 = vunpack.c.l.b16 %v232
      %v313 = vunpack.c.l.b16 %v233
      %v314 = vunpack.c.l.b16 %v234
      %v315 = vunpack.c.l.b16 %v235
      %v316 = vunpack.c.l.b16 %v236
      %v317 = vunpack.c.l.b16 %v237
      %v318 = vunpack.c.l.b16 %v238
      %v319 = vunpack.c.l.b16 %v239
      %v320 = vunpack.c.l.b16 %v240
      %v321 = vunpack.c.l.b16 %v241
      %v322 = vunpack.c.l.b16 %v242
      %v323 = vunpack.c.l.b16 %v243
      %v324 = vunpack.c.l.b16 %v244
      %v325 = vunpack.c.l.b16 %v245
      %v326 = vunpack.c.l.b16 %v246
      %v327 = vunpack.c.l.b16 %v247
      %v328 = vunpack.c.l.b16 %v248
      %v329 = vunpack.c.l.b16 %v249
      %v330 = vunpack.c.l.b16 %v250
      %v331 = vunpack.c.l.b16 %v251
      %v332 = vunpack.c.l.b16 %v252
      %v333 = vunpack.c.l.b16 %v253
      %v334 = vunpack.c.l.b16 %v254
      %v335 = vunpack.c.l.b16 %v255
      %v336 = vunpack.c.l.b16 %v256
      %v337 = vpack.c.b16 %v300, %v299
      %v338 = vpack.c.b16 %v302, %v301
      %v339 = vpack.c.b16 %v304, %v303
      %v340 = vpack.c.b16 %v306, %v305
      %v341 = vpack.c.b16 %v308, %v307
      %v342 = vpack.c.b16 %v310, %v309
      %v343 = vpack.c.b16 %v312, %v311
      %v344 = vpack.c.b16 %v314, %v313
      %v345 = vpack.c.b16 %v316, %v315
      %v346 = vpack.c.b16 %v318, %v317
      %v347 = vpack.c.b16 %v320, %v319
      %v348 = vpack.c.b16 %v322, %v321
      %v349 = vpack.c.b16 %v324, %v323
      %v350 = vpack.c.b16 %v326, %v325
      %v351 = vpack.c.b16 %v328, %v327
      %v352 = vpack.c.b16 %v330, %v329
      %v353 = vpack.c.b16 %v332, %v331
      %v354 = vpack.c.b16 %v334, %v333
      %v355 = vpack.c.b16 %v336, %v335
      %v360 = vunpack.c.l.b16 %v257
      %v361 = vunpack.c.l.b16 %v258
      %v362 = vunpack.c.l.b16 %v259
      %v363 = vunpack.c.l.b16 %v260
      %v364 = vpack.c.b16 %v361, %v360
      %v365 = vpack.c.b16 %v363, %v362
      %vm368 = vcmask 261120
      %v370 = vsel %vm368, %v337, 0
      %v373 = vsel %vm368, %v338, 0
      %v376 = vsel %vm368, %v339, 0
      %v379 = vsel %vm368, %v340, 0
      %v382 = vsel %vm368, %v341, 0
      %v385 = vsel %vm368, %v342, 0
      %v388 = vsel %vm368, %v343, 0
      %v391 = vsel %vm368, %v344, 0
      %v394 = vsel %vm368, %v345, 0
      %v397 = vsel %vm368, %v346, 0
      %v400 = vsel %vm368, %v347, 0
      %v403 = vsel %vm368, %v348, 0
      %v406 = vsel %vm368, %v349, 0
      %v409 = vsel %vm368, %v350, 0
      %v412 = vsel %vm368, %v351, 0
      %v415 = vsel %vm368, %v352, 0
      %v418 = vsel %vm368, %v353, 0
      %v421 = vsel %vm368, %v354, 0
      %v424 = vsel %vm368, %v355, 0
      %426 = vmatprep.subr.bf16.mxu0 0
      %427 = vmatpush1.bf16.msra.mxu0 0
      %428 = vmatprep.subr.bf16.mxu0 0
      %429 = vmatpush1.bf16.msra.mxu0 0
      %430 = vmatprep.subr.bf16.mxu0 0
      %431 = vmatpush1.bf16.msra.mxu0 0
      %432 = vmatprep.subr.bf16.mxu0 0
      %433 = vmatpush1.bf16.msra.mxu0 0
      %434 = vmatprep.subr.bf16.mxu0 0
      %435 = vmatpush1.bf16.msra.mxu0 0
      %436 = vmatprep.subr.bf16.mxu0 0
      %437 = vmatpush1.bf16.msra.mxu0 0
      %438 = vmatprep.subr.bf16.mxu0 0
      %439 = vmatpush1.bf16.msra.mxu0 %v365
      %440 = vmatprep.subr.bf16.mxu0 0
      %441 = vmatpush1.bf16.msra.mxu0 %v364
      %442 = vmatprep.subr.bf16.mxu0 0
      %443 = vmatpush2.bf16.msra.mxu0 0
      %444 = vmatprep.subr.bf16.mxu0 0
      %445 = vmatpush2.bf16.msra.mxu0 0
      %446 = vmatprep.subr.bf16.mxu0 0
      %447 = vmatpush2.bf16.msra.mxu0 0
      %448 = vmatprep.subr.bf16.mxu0 0
      %449 = vmatpush2.bf16.msra.mxu0 0
      %450 = vmatprep.subr.bf16.mxu0 0
      %451 = vmatpush2.bf16.msra.mxu0 0
      %452 = vmatprep.subr.bf16.mxu0 0
      %453 = vmatpush2.bf16.msra.mxu0 0
      %454 = vmatprep.subr.bf16.mxu0 0
      %455 = vmatpush2.bf16.msra.mxu0 0
      %456 = vmatprep.subr.bf16.mxu0 0
      %457 = vmatpush2.bf16.msra.mxu0 0
      %458 = vmatprep.mubr.bf16.mxu0 0
      %459 = vmatmul.mubr.bf16.gmra.mxu0 %v370
      %v460 = vpop.f32.mrf.mxu0
      %v461 = vadd.f32 0.0, %v460
      %v462 = vpop.f32.mrf.mxu0
      %v463 = vpop.f32.mrf.mxu0
      %v464 = vadd.f32 0.0, %v463
      %v465 = vpop.f32.mrf.mxu0
      %466 = vmatprep.mubr.bf16.mxu0 0
      %467 = vmatmul.mubr.bf16.gmra.mxu0 %v373
      %v468 = vpop.f32.mrf.mxu0
      %v469 = vadd.f32 0.0, %v468
      %v470 = vpop.f32.mrf.mxu0
      %v471 = vpop.f32.mrf.mxu0
      %v472 = vadd.f32 0.0, %v471
      %v473 = vpop.f32.mrf.mxu0
      %474 = vmatprep.mubr.bf16.mxu0 0
      %475 = vmatmul.mubr.bf16.gmra.mxu0 %v376
      %v476 = vpop.f32.mrf.mxu0
      %v477 = vadd.f32 0.0, %v476
      %v478 = vpop.f32.mrf.mxu0
      %v479 = vpop.f32.mrf.mxu0
      %v480 = vadd.f32 0.0, %v479
      %v481 = vpop.f32.mrf.mxu0
      %482 = vmatprep.mubr.bf16.mxu0 0
      %483 = vmatmul.mubr.bf16.gmra.mxu0 %v379
      %v484 = vpop.f32.mrf.mxu0
      %v485 = vadd.f32 0.0, %v484
      %v486 = vpop.f32.mrf.mxu0
      %v487 = vpop.f32.mrf.mxu0
      %v488 = vadd.f32 0.0, %v487
      %v489 = vpop.f32.mrf.mxu0
      %490 = vmatprep.mubr.bf16.mxu0 0
      %491 = vmatmul.mubr.bf16.gmra.mxu0 %v382
      %v492 = vpop.f32.mrf.mxu0
      %v493 = vadd.f32 0.0, %v492
      %v494 = vpop.f32.mrf.mxu0
      %v495 = vpop.f32.mrf.mxu0
      %v496 = vadd.f32 0.0, %v495
      %v497 = vpop.f32.mrf.mxu0
      %498 = vmatprep.mubr.bf16.mxu0 0
      %499 = vmatmul.mubr.bf16.gmra.mxu0 %v385
      %v500 = vpop.f32.mrf.mxu0
      %v501 = vadd.f32 0.0, %v500
      %v502 = vpop.f32.mrf.mxu0
      %v503 = vpop.f32.mrf.mxu0
      %v504 = vadd.f32 0.0, %v503
      %v505 = vpop.f32.mrf.mxu0
      %506 = vmatprep.mubr.bf16.mxu0 0
      %507 = vmatmul.mubr.bf16.gmra.mxu0 %v388
      %v508 = vpop.f32.mrf.mxu0
      %v509 = vadd.f32 0.0, %v508
      %v510 = vpop.f32.mrf.mxu0
      %v511 = vpop.f32.mrf.mxu0
      %v512 = vadd.f32 0.0, %v511
      %v513 = vpop.f32.mrf.mxu0
      %514 = vmatprep.mubr.bf16.mxu0 0
      %515 = vmatmul.mubr.bf16.gmra.mxu0 %v391
      %v516 = vpop.f32.mrf.mxu0
      %v517 = vadd.f32 0.0, %v516
      %v518 = vpop.f32.mrf.mxu0
      %v519 = vpop.f32.mrf.mxu0
      %v520 = vadd.f32 0.0, %v519
      %v521 = vpop.f32.mrf.mxu0
      %522 = vmatprep.mubr.bf16.mxu0 0
      %523 = vmatmul.mubr.bf16.gmra.mxu0 %v394
      %v524 = vpop.f32.mrf.mxu0
      %v525 = vadd.f32 0.0, %v524
      %v526 = vpop.f32.mrf.mxu0
      %v527 = vpop.f32.mrf.mxu0
      %v528 = vadd.f32 0.0, %v527
      %v529 = vpop.f32.mrf.mxu0
      %530 = vmatprep.mubr.bf16.mxu0 0
      %531 = vmatmul.mubr.bf16.gmra.mxu0 %v397
      %v532 = vpop.f32.mrf.mxu0
      %v533 = vadd.f32 0.0, %v532
      %v534 = vpop.f32.mrf.mxu0
      %v535 = vpop.f32.mrf.mxu0
      %v536 = vadd.f32 0.0, %v535
      %v537 = vpop.f32.mrf.mxu0
      %538 = vmatprep.mubr.bf16.mxu0 0
      %539 = vmatmul.mubr.bf16.gmra.mxu0 %v400
      %v540 = vpop.f32.mrf.mxu0
      %v541 = vadd.f32 0.0, %v540
      %v542 = vpop.f32.mrf.mxu0
      %v543 = vpop.f32.mrf.mxu0
      %v544 = vadd.f32 0.0, %v543
      %v545 = vpop.f32.mrf.mxu0
      %546 = vmatprep.mubr.bf16.mxu0 0
      %547 = vmatmul.mubr.bf16.gmra.mxu0 %v403
      %v548 = vpop.f32.mrf.mxu0
      %v549 = vadd.f32 0.0, %v548
      %v550 = vpop.f32.mrf.mxu0
      %v551 = vpop.f32.mrf.mxu0
      %v552 = vadd.f32 0.0, %v551
      %v553 = vpop.f32.mrf.mxu0
      %554 = vmatprep.mubr.bf16.mxu0 0
      %555 = vmatmul.mubr.bf16.gmra.mxu0 %v406
      %v556 = vpop.f32.mrf.mxu0
      %v557 = vadd.f32 0.0, %v556
      %v558 = vpop.f32.mrf.mxu0
      %v559 = vpop.f32.mrf.mxu0
      %v560 = vadd.f32 0.0, %v559
      %v561 = vpop.f32.mrf.mxu0
      %562 = vmatprep.mubr.bf16.mxu0 0
      %563 = vmatmul.mubr.bf16.gmra.mxu0 %v409
      %v564 = vpop.f32.mrf.mxu0
      %v565 = vadd.f32 0.0, %v564
      %v566 = vpop.f32.mrf.mxu0
      %v567 = vpop.f32.mrf.mxu0
      %v568 = vadd.f32 0.0, %v567
      %v569 = vpop.f32.mrf.mxu0
      %570 = vmatprep.mubr.bf16.mxu0 0
      %571 = vmatmul.mubr.bf16.gmra.mxu0 %v412
      %v572 = vpop.f32.mrf.mxu0
      %v573 = vadd.f32 0.0, %v572
      %v574 = vpop.f32.mrf.mxu0
      %v575 = vpop.f32.mrf.mxu0
      %v576 = vadd.f32 0.0, %v575
      %v577 = vpop.f32.mrf.mxu0
      %578 = vmatprep.mubr.bf16.mxu0 0
      %579 = vmatmul.mubr.bf16.gmra.mxu0 %v415
      %v580 = vpop.f32.mrf.mxu0
      %v581 = vadd.f32 0.0, %v580
      %v582 = vpop.f32.mrf.mxu0
      %v583 = vpop.f32.mrf.mxu0
      %v584 = vadd.f32 0.0, %v583
      %v585 = vpop.f32.mrf.mxu0
      %586 = vmatprep.mubr.bf16.mxu0 0
      %587 = vmatmul.mubr.bf16.gmra.mxu0 %v418
      %v588 = vpop.f32.mrf.mxu0
      %v589 = vadd.f32 0.0, %v588
      %v590 = vpop.f32.mrf.mxu0
      %v591 = vpop.f32.mrf.mxu0
      %v592 = vadd.f32 0.0, %v591
      %v593 = vpop.f32.mrf.mxu0
      %594 = vmatprep.mubr.bf16.mxu0 0
      %595 = vmatmul.mubr.bf16.gmra.mxu0 %v421
      %v596 = vpop.f32.mrf.mxu0
      %v597 = vadd.f32 0.0, %v596
      %v598 = vpop.f32.mrf.mxu0
      %v599 = vpop.f32.mrf.mxu0
      %v600 = vadd.f32 0.0, %v599
      %v601 = vpop.f32.mrf.mxu0
      %602 = vmatprep.mubr.bf16.mxu0 0
      %603 = vmatmul.mubr.bf16.gmra.mxu0 %v424
      %v604 = vpop.f32.mrf.mxu0
      %v605 = vadd.f32 0.0, %v604
      %v606 = vpop.f32.mrf.mxu0
      %v607 = vpop.f32.mrf.mxu0
      %v608 = vadd.f32 0.0, %v607
      %v609 = vpop.f32.mrf.mxu0
      %610 = vdwg.mxu0
      %v611 = vpack.c.bf16 %v464, %v461
      %v612 = vpack.c.bf16 %v472, %v469
      %v613 = vpack.c.bf16 %v480, %v477
      %v614 = vpack.c.bf16 %v488, %v485
      %v615 = vpack.c.bf16 %v496, %v493
      %v616 = vpack.c.bf16 %v504, %v501
      %v617 = vpack.c.bf16 %v512, %v509
      %v618 = vpack.c.bf16 %v520, %v517
      %v619 = vpack.c.bf16 %v528, %v525
      %v620 = vpack.c.bf16 %v536, %v533
      %v621 = vpack.c.bf16 %v544, %v541
      %v622 = vpack.c.bf16 %v552, %v549
      %v623 = vpack.c.bf16 %v560, %v557
      %v624 = vpack.c.bf16 %v568, %v565
      %v625 = vpack.c.bf16 %v576, %v573
      %v626 = vpack.c.bf16 %v584, %v581
      %v627 = vpack.c.bf16 %v592, %v589
      %v628 = vpack.c.bf16 %v600, %v597
      %v629 = vpack.c.bf16 %v608, %v605
      %v649 = vunpack.c.l.b16 %v611
      %v650 = vunpack.c.h.b16 %v611
      %v651 = vunpack.c.l.b16 %v612
      %v652 = vunpack.c.h.b16 %v612
      %v653 = vunpack.c.l.b16 %v613
      %v654 = vunpack.c.h.b16 %v613
      %v655 = vunpack.c.l.b16 %v614
      %v656 = vunpack.c.h.b16 %v614
      %v657 = vunpack.c.l.b16 %v615
      %v658 = vunpack.c.h.b16 %v615
      %v659 = vunpack.c.l.b16 %v616
      %v660 = vunpack.c.h.b16 %v616
      %v661 = vunpack.c.l.b16 %v617
      %v662 = vunpack.c.h.b16 %v617
      %v663 = vunpack.c.l.b16 %v618
      %v664 = vunpack.c.h.b16 %v618
      %v665 = vunpack.c.l.b16 %v619
      %v666 = vunpack.c.h.b16 %v619
      %v667 = vunpack.c.l.b16 %v620
      %v668 = vunpack.c.h.b16 %v620
      %v669 = vunpack.c.l.b16 %v621
      %v670 = vunpack.c.h.b16 %v621
      %v671 = vunpack.c.l.b16 %v622
      %v672 = vunpack.c.h.b16 %v622
      %v673 = vunpack.c.l.b16 %v623
      %v674 = vunpack.c.h.b16 %v623
      %v675 = vunpack.c.l.b16 %v624
      %v676 = vunpack.c.h.b16 %v624
      %v677 = vunpack.c.l.b16 %v625
      %v678 = vunpack.c.h.b16 %v625
      %v679 = vunpack.c.l.b16 %v626
      %v680 = vunpack.c.h.b16 %v626
      %v681 = vunpack.c.l.b16 %v627
      %v682 = vunpack.c.h.b16 %v627
      %v683 = vunpack.c.l.b16 %v628
      %v684 = vunpack.c.h.b16 %v628
      %v685 = vunpack.c.l.b16 %v629
      %v686 = vunpack.c.h.b16 %v629
      %v687 = vpack.c.b16 %v649, %v649
      %v688 = vpack.c.b16 %v650, %v650
      %v689 = vpack.c.b16 %v651, %v651
      %v690 = vpack.c.b16 %v652, %v652
      %v691 = vpack.c.b16 %v653, %v653
      %v692 = vpack.c.b16 %v654, %v654
      %v693 = vpack.c.b16 %v655, %v655
      %v694 = vpack.c.b16 %v656, %v656
      %v695 = vpack.c.b16 %v657, %v657
      %v696 = vpack.c.b16 %v658, %v658
      %v697 = vpack.c.b16 %v659, %v659
      %v698 = vpack.c.b16 %v660, %v660
      %v699 = vpack.c.b16 %v661, %v661
      %v700 = vpack.c.b16 %v662, %v662
      %v701 = vpack.c.b16 %v663, %v663
      %v702 = vpack.c.b16 %v664, %v664
      %v703 = vpack.c.b16 %v665, %v665
      %v704 = vpack.c.b16 %v666, %v666
      %v705 = vpack.c.b16 %v667, %v667
      %v706 = vpack.c.b16 %v668, %v668
      %v707 = vpack.c.b16 %v669, %v669
      %v708 = vpack.c.b16 %v670, %v670
      %v709 = vpack.c.b16 %v671, %v671
      %v710 = vpack.c.b16 %v672, %v672
      %v711 = vpack.c.b16 %v673, %v673
      %v712 = vpack.c.b16 %v674, %v674
      %v713 = vpack.c.b16 %v675, %v675
      %v714 = vpack.c.b16 %v676, %v676
      %v715 = vpack.c.b16 %v677, %v677
      %v716 = vpack.c.b16 %v678, %v678
      %v717 = vpack.c.b16 %v679, %v679
      %v718 = vpack.c.b16 %v680, %v680
      %v719 = vpack.c.b16 %v681, %v681
      %v720 = vpack.c.b16 %v682, %v682
      %v721 = vpack.c.b16 %v683, %v683
      %v722 = vpack.c.b16 %v684, %v684
      %v723 = vpack.c.b16 %v685, %v685
      %v724 = vpack.c.b16 %v686, %v686
      %763 = vst [vmem:[%s210] sm:$0xf] %v687
      %764 = vst [vmem:[%s210 + $0x4] sm:$0xf] %v688
      %765 = vst [vmem:[%s210 + $0x8] sm:$0xf] %v689
      %766 = vst [vmem:[%s210 + $0xc] sm:$0xf] %v690
      %767 = vst [vmem:[%s210 + $0x10] sm:$0xf] %v691
      %768 = vst [vmem:[%s210 + $0x14] sm:$0xf] %v692
      %769 = vst [vmem:[%s210 + $0x18] sm:$0xf] %v693
      %770 = vst [vmem:[%s210 + $0x1c] sm:$0xf] %v694
      %771 = vst [vmem:[%s210 + $0x20] sm:$0xf] %v695
      %772 = vst [vmem:[%s210 + $0x24] sm:$0xf] %v696
      %773 = vst [vmem:[%s210 + $0x28] sm:$0xf] %v697
      %774 = vst [vmem:[%s210 + $0x2c] sm:$0xf] %v698
      %775 = vst [vmem:[%s210 + $0x30] sm:$0xf] %v699
      %776 = vst [vmem:[%s210 + $0x34] sm:$0xf] %v700
      %777 = vst [vmem:[%s210 + $0x38] sm:$0xf] %v701
      %778 = vst [vmem:[%s210 + $0x3c] sm:$0xf] %v702
      %779 = vst [vmem:[%s210 + $0x40] sm:$0xf] %v703
      %780 = vst [vmem:[%s210 + $0x44] sm:$0xf] %v704
      %781 = vst [vmem:[%s210 + $0x48] sm:$0xf] %v705
      %782 = vst [vmem:[%s210 + $0x4c] sm:$0xf] %v706
      %783 = vst [vmem:[%s210 + $0x50] sm:$0xf] %v707
      %784 = vst [vmem:[%s210 + $0x54] sm:$0xf] %v708
      %785 = vst [vmem:[%s210 + $0x58] sm:$0xf] %v709
      %786 = vst [vmem:[%s210 + $0x5c] sm:$0xf] %v710
      %787 = vst [vmem:[%s210 + $0x60] sm:$0xf] %v711
      %788 = vst [vmem:[%s210 + $0x64] sm:$0xf] %v712
      %789 = vst [vmem:[%s210 + $0x68] sm:$0xf] %v713
      %790 = vst [vmem:[%s210 + $0x6c] sm:$0xf] %v714
      %791 = vst [vmem:[%s210 + $0x70] sm:$0xf] %v715
      %792 = vst [vmem:[%s210 + $0x74] sm:$0xf] %v716
      %793 = vst [vmem:[%s210 + $0x78] sm:$0xf] %v717
      %794 = vst [vmem:[%s210 + $0x7c] sm:$0xf] %v718
      %795 = vst [vmem:[%s210 + $0x80] sm:$0xf] %v719
      %796 = vst [vmem:[%s210 + $0x84] sm:$0xf] %v720
      %797 = vst [vmem:[%s210 + $0x88] sm:$0xf] %v721
      %798 = vst [vmem:[%s210 + $0x8c] sm:$0xf] %v722
      %799 = vst [vmem:[%s210 + $0x90] sm:$0xf] %v723
      %800 = vst [vmem:[%s210 + $0x94] sm:$0xf] %v724
      %v801 = vadd.f32 %v461, %v464
      %v802 = vadd.f32 %v801, %v469
      %v803 = vadd.f32 %v802, %v472
      %v804 = vadd.f32 %v803, %v477
      %v805 = vadd.f32 %v804, %v480
      %v806 = vadd.f32 %v805, %v485
      %v807 = vadd.f32 %v806, %v488
      %v808 = vadd.f32 %v807, %v493
      %v809 = vadd.f32 %v808, %v496
      %v810 = vadd.f32 %v809, %v501
      %v811 = vadd.f32 %v810, %v504
      %v812 = vadd.f32 %v811, %v509
      %v813 = vadd.f32 %v812, %v512
      %v814 = vadd.f32 %v813, %v517
      %v815 = vadd.f32 %v814, %v520
      %v816 = vadd.f32 %v815, %v525
      %v817 = vadd.f32 %v816, %v528
      %v818 = vadd.f32 %v817, %v533
      %v819 = vadd.f32 %v818, %v536
      %v820 = vadd.f32 %v819, %v541
      %v821 = vadd.f32 %v820, %v544
      %v822 = vadd.f32 %v821, %v549
      %v823 = vadd.f32 %v822, %v552
      %v824 = vadd.f32 %v823, %v557
      %v825 = vadd.f32 %v824, %v560
      %v826 = vadd.f32 %v825, %v565
      %v827 = vadd.f32 %v826, %v568
      %v828 = vadd.f32 %v827, %v573
      %v829 = vadd.f32 %v828, %v576
      %v830 = vadd.f32 %v829, %v581
      %v831 = vadd.f32 %v830, %v584
      %v832 = vadd.f32 %v831, %v589
      %v833 = vadd.f32 %v832, %v592
      %v834 = vadd.f32 %v833, %v597
      %v835 = vadd.f32 %v834, %v600
      %v836 = vadd.f32 %v835, %v605
      %v837 = vadd.f32 %v836, %v608
      %v838 = vrot.slane %v837, 4
      %v839 = vadd.f32 %v837, %v838
      %v840 = vrot.slane %v839, 2
      %v841 = vadd.f32 %v839, %v840
      %v842 = vrot.slane %v841, 1
      %v843 = vadd.f32 %v841, %v842
      %844 = vst [vmem:[%s214] sm:$0x1] %v843
      %v845 = vmul.f32 %v461, %v461
      %v846 = vmul.f32 %v464, %v464
      %v847 = vmul.f32 %v469, %v469
      %v848 = vmul.f32 %v472, %v472
      %v849 = vmul.f32 %v477, %v477
      %v850 = vmul.f32 %v480, %v480
      %v851 = vmul.f32 %v485, %v485
      %v852 = vmul.f32 %v488, %v488
      %v853 = vmul.f32 %v493, %v493
      %v854 = vmul.f32 %v496, %v496
      %v855 = vmul.f32 %v501, %v501
      %v856 = vmul.f32 %v504, %v504
      %v857 = vmul.f32 %v509, %v509
      %v858 = vmul.f32 %v512, %v512
      %v859 = vmul.f32 %v517, %v517
      %v860 = vmul.f32 %v520, %v520
      %v861 = vmul.f32 %v525, %v525
      %v862 = vmul.f32 %v528, %v528
      %v863 = vmul.f32 %v533, %v533
      %v864 = vmul.f32 %v536, %v536
      %v865 = vmul.f32 %v541, %v541
      %v866 = vmul.f32 %v544, %v544
      %v867 = vmul.f32 %v549, %v549
      %v868 = vmul.f32 %v552, %v552
      %v869 = vmul.f32 %v557, %v557
      %v870 = vmul.f32 %v560, %v560
      %v871 = vmul.f32 %v565, %v565
      %v872 = vmul.f32 %v568, %v568
      %v873 = vmul.f32 %v573, %v573
      %v874 = vmul.f32 %v576, %v576
      %v875 = vmul.f32 %v581, %v581
      %v876 = vmul.f32 %v584, %v584
      %v877 = vmul.f32 %v589, %v589
      %v878 = vmul.f32 %v592, %v592
      %v879 = vmul.f32 %v597, %v597
      %v880 = vmul.f32 %v600, %v600
      %v881 = vmul.f32 %v605, %v605
      %v882 = vmul.f32 %v608, %v608
      %v883 = vadd.f32 %v845, %v846
      %v884 = vadd.f32 %v883, %v847
      %v885 = vadd.f32 %v884, %v848
      %v886 = vadd.f32 %v885, %v849
      %v887 = vadd.f32 %v886, %v850
      %v888 = vadd.f32 %v887, %v851
      %v889 = vadd.f32 %v888, %v852
      %v890 = vadd.f32 %v889, %v853
      %v891 = vadd.f32 %v890, %v854
      %v892 = vadd.f32 %v891, %v855
      %v893 = vadd.f32 %v892, %v856
      %v894 = vadd.f32 %v893, %v857
      %v895 = vadd.f32 %v894, %v858
      %v896 = vadd.f32 %v895, %v859
      %v897 = vadd.f32 %v896, %v860
      %v898 = vadd.f32 %v897, %v861
      %v899 = vadd.f32 %v898, %v862
      %v900 = vadd.f32 %v899, %v863
      %v901 = vadd.f32 %v900, %v864
      %v902 = vadd.f32 %v901, %v865
      %v903 = vadd.f32 %v902, %v866
      %v904 = vadd.f32 %v903, %v867
      %v905 = vadd.f32 %v904, %v868
      %v906 = vadd.f32 %v905, %v869
      %v907 = vadd.f32 %v906, %v870
      %v908 = vadd.f32 %v907, %v871
      %v909 = vadd.f32 %v908, %v872
      %v910 = vadd.f32 %v909, %v873
      %v911 = vadd.f32 %v910, %v874
      %v912 = vadd.f32 %v911, %v875
      %v913 = vadd.f32 %v912, %v876
      %v914 = vadd.f32 %v913, %v877
      %v915 = vadd.f32 %v914, %v878
      %v916 = vadd.f32 %v915, %v879
      %v917 = vadd.f32 %v916, %v880
      %v918 = vadd.f32 %v917, %v881
      %v919 = vadd.f32 %v918, %v882
      %v920 = vrot.slane %v919, 4
      %v921 = vadd.f32 %v919, %v920
      %v922 = vrot.slane %v921, 2
      %v923 = vadd.f32 %v921, %v922
      %v924 = vrot.slane %v923, 1
      %v925 = vadd.f32 %v923, %v924
      %926 = vst [vmem:[%s217] sm:$0x1] %v925
      %s927 = smul.u32 38, %s16
      %p928 = scmp.lt.s32.totalorder %s927, 75
      %s929 = scalar_select %p928, %s927, 75
      %s930 = smul.addr %s929, 4
      %s931 = scalar_lea.vmem %s2, %s930
      %p932 = scmp.lt.s32.totalorder %s16, 1
      %s933 = scalar_select %p932, %s16, 1
      %s934 = scalar_lea.vmem %s3, %s933
      %p935 = scmp.lt.s32.totalorder %s16, 1
      %s936 = scalar_select %p935, %s16, 1
      %s937 = scalar_lea.vmem %s4, %s936
      // Predicated region
      $region29: #{conv_block_forward.2} parent=27 // pred_check
        %p938 = pneg %p81
      $region30: #{conv_block_forward.2} parent=27 // pred_check_branch
        %940 = sbr.rel (%p938) target = $region32
      $region31: #{conv_block_forward.2} parent=27 // pred_region
        %s941 = smul.u32 38, %s16
      $region32: #{conv_block_forward.2} parent=27 // pred_fallthru
        _
      // Predicated region
      $region33: #{conv_block_forward.2} parent=27 // pred_check
        %p942 = pneg %p107
      $region34: #{conv_block_forward.2} parent=27 // pred_check_branch
        %944 = sbr.rel (%p942) target = $region36
      $region35: #{conv_block_forward.2} parent=27 // pred_region
        _
      $region36: #{conv_block_forward.2} parent=27 // pred_fallthru
        _
      // Predicated region
      $region37: #{conv_block_forward.2} parent=27 // pred_check
        %p945 = pneg %p133
      $region38: #{conv_block_forward.2} parent=27 // pred_check_branch
        %947 = sbr.rel (%p945) target = $region40
      $region39: #{conv_block_forward.2} parent=27 // pred_region
        _
      $region40: #{conv_block_forward.2} parent=27 // pred_fallthru
        _
    $region28: #{conv_block_forward.2} parent=5 // pred_fallthru
      _
    %p948 = scmp.le.s32.totalorder 2, %s11
    // Predicated region
    $region41: #{conv_block_forward.2} parent=5 // pred_check
      %p949 = pneg %p948
    $region42: #{conv_block_forward.2} parent=5 // pred_check_branch
      %951 = sbr.rel (%p949) target = $region44
    $region43: #{conv_block_forward.2} parent=5 // pred_region
      %s952 = ssub.s32 %s11, 2
      // Predicated region
      $region45: #{conv_block_forward.2} parent=43 // pred_check
        %p953 = pneg %p87
      $region46: #{conv_block_forward.2} parent=43 // pred_check_branch
        %955 = sbr.rel (%p953) target = $region48
      $region47: #{conv_block_forward.2} parent=43 // pred_region
        %s956 = smul.u32 38, %s17
        %p957 = scmp.lt.s32.totalorder %s956, 75
        %s958 = scalar_select %p957, %s956, 75
        %s959 = smul.addr %s958, 4
        %s960 = scalar_lea.vmem %s2, %s959
      $region48: #{conv_block_forward.2} parent=43 // pred_fallthru
        _
      // Predicated region
      $region49: #{conv_block_forward.2} parent=43 // pred_check
        %p961 = pneg %p113
      $region50: #{conv_block_forward.2} parent=43 // pred_check_branch
        %963 = sbr.rel (%p961) target = $region52
      $region51: #{conv_block_forward.2} parent=43 // pred_region
        %p964 = scmp.lt.s32.totalorder %s17, 1
        %s965 = scalar_select %p964, %s17, 1
        %s966 = scalar_lea.vmem %s3, %s965
      $region52: #{conv_block_forward.2} parent=43 // pred_fallthru
        _
      // Predicated region
      $region53: #{conv_block_forward.2} parent=43 // pred_check
        %p967 = pneg %p139
      $region54: #{conv_block_forward.2} parent=43 // pred_check_branch
        %969 = sbr.rel (%p967) target = $region56
      $region55: #{conv_block_forward.2} parent=43 // pred_region
        %p970 = scmp.lt.s32.totalorder %s17, 1
        %s971 = scalar_select %p970, %s17, 1
        %s972 = scalar_lea.vmem %s4, %s971
      $region56: #{conv_block_forward.2} parent=43 // pred_fallthru
        _
    $region44: #{conv_block_forward.2} parent=5 // pred_fallthru
      _
  $region6: #{conv_block_forward.2} parent=0 // loop_footer
    %s15 = sadd.s32 1, %s11
  $region7: #{conv_block_forward.2} parent=0 // loop_footer_branch
    %10 = sbr.rel target = $region3
  $region8: #{conv_block_forward.2} parent=0 // loop_exit
    _

</llo_original>
